<compile_context>
chip_gen: v7x
topology: tpu7x:2x2x1
jax: 0.10.0
libtpu: 0.0.40
codegen_flags: <defaults>
</compile_context>

<pallas_src>
import jax
import jax.numpy as jnp
from jax.experimental import pallas as pl
from jax.experimental.pallas import tpu as pltpu


# ----------------------------------------------------------------------------
# Fused Pallas kernel (channel-first: features live as (C, HW))
# ----------------------------------------------------------------------------
def _deploy_fused_kernel(x_ref, sw_ref, sb_ref,
                         ca0w_ref, ca0b_ref, ca1w_ref, ca1b_ref,
                         h0w_ref, h0b_ref, h1w_ref, h1b_ref,
                         poolT_ref, out0_ref, out1_ref):
    # Stem 1x1 conv + SiLU:  (CH, Cin_p) @ (Cin_p, HW) + b
    f = jnp.dot(sw_ref[...], x_ref[...],
                preferred_element_type=jnp.float32) + sb_ref[...]
    f = f * jax.nn.sigmoid(f)                                       # (CH, HW)

    # ChannelAttention level 0 (global_avgpool == forward_gvp).
    # mean_HW(W @ f) == W @ mean_HW(f): keeps the matmul lane-dense and avoids
    # a degenerate (CH,CH)@(CH,1) matvec; the reduction runs on the XLU.
    t0 = jnp.dot(ca0w_ref[...], f, preferred_element_type=jnp.float32)
    a0 = jax.nn.sigmoid(jnp.mean(t0, axis=1, keepdims=True) + ca0b_ref[...])
    f0 = f * a0                                                     # (CH, HW)

    # Head level 0: single fused (cls|reg|obj) 1x1 conv; lane-dense store.
    out0_ref[...] = (jnp.dot(h0w_ref[...], f0,
                             preferred_element_type=jnp.float32)
                     + h0b_ref[...]).astype(out0_ref.dtype)          # (Ctot, HW)

    # Stride-2 average pool folded in as a matmul with a 0/0.25 pooling matrix.
    f1 = jnp.dot(f0, poolT_ref[...],
                 preferred_element_type=jnp.float32)                # (CH, HW/4)

    # ChannelAttention level 1.
    t1 = jnp.dot(ca1w_ref[...], f1, preferred_element_type=jnp.float32)
    a1 = jax.nn.sigmoid(jnp.mean(t1, axis=1, keepdims=True) + ca1b_ref[...])
    f1 = f1 * a1

    # Head level 1 (fused conv).
    out1_ref[...] = (jnp.dot(h1w_ref[...], f1,
                             preferred_element_type=jnp.float32)
                     + h1b_ref[...]).astype(out1_ref.dtype)          # (Ctot, HW/4)


# ----------------------------------------------------------------------------
# Glue: ImplicitA / ImplicitM folding (DeployModel.forward_single) & params
# ----------------------------------------------------------------------------
def fold_implicit(conv_w, conv_b, implicit_a, implicit_m):
    """Fold ImplicitA (additive, per in-channel) and ImplicitM (mult, per
    out-channel) into the 1x1 conv, exactly as DeployModel.forward_single:
        bias   = (bias + W @ a) * m
        weight = W * m[:, None]
    Returns channel-first weight (Cout, Cin) and bias (Cout,)."""
    b = (conv_b + conv_w @ implicit_a) * implicit_m
    w = conv_w * implicit_m[:, None]
    return w, b


def make_params(key, cin, ch, num_classes, num_base_priors, num_levels):
    keys = iter(jax.random.split(key, 64))

    def nrm(shape, scale=0.1):
        return scale * jax.random.normal(next(keys), shape, jnp.float32)

    params = {
        "stem_w": nrm((ch, cin)),
        "stem_b": nrm((ch,)),
        "ca": [{"w": nrm((ch, ch)), "b": nrm((ch,))} for _ in range(num_levels)],
        "head": [],
    }
    head_channels = {
        "cls": num_classes * num_base_priors,
        "reg": 4 * num_base_priors,
        "obj": 1 * num_base_priors,
    }
    for _ in range(num_levels):
        lvl = {}
        for name, cout in head_channels.items():
            conv_w = nrm((cout, ch))
            conv_b = nrm((cout,))
            impl_a = nrm((ch,), 0.05)
            impl_m = 1.0 + nrm((cout,), 0.05)
            lvl[name] = fold_implicit(conv_w, conv_b, impl_a, impl_m)
        params["head"].append(lvl)
    return params


def make_pool_matrix(H, W):
    """(HW, HW/4) matrix PT with 0.25 at the 4 source pixels of each pooled
    cell, so (C, HW) @ PT == exact 2x2 average pool (NCHW row order)."""
    Hp, Wp = H // 2, W // 2
    src = jnp.arange(H * W)
    h, w = src // W, src % W
    dst = (h // 2) * Wp + (w // 2)
    return jnp.zeros((H * W, Hp * Wp), jnp.float32).at[src, dst].set(0.25)


# ----------------------------------------------------------------------------
# DeployModel.forward (with_postprocess=False, transpose=False)
# ----------------------------------------------------------------------------
def deploy_model_forward(x_nchw, params):
    N, Cin, H, W = x_nchw.shape
    HW, HW4 = H * W, (H // 2) * (W // 2)
    CH = params["stem_w"].shape[0]

    # Channel-first flatten (free reshape) + pad Cin to a sublane multiple.
    cin_p = ((Cin + 7) // 8) * 8
    x = jnp.pad(x_nchw.reshape(N, Cin, HW), ((0, 0), (0, cin_p - Cin), (0, 0)))
    stem_w = jnp.pad(params["stem_w"], ((0, 0), (0, cin_p - Cin)))

    # Fuse the three head branches into one matmul per level.
    # Row order cls|reg|obj == torch.cat(feats, dim=1).
    head_w, head_b = [], []
    for lvl in range(2):
        hp = params["head"][lvl]
        head_w.append(jnp.concatenate([hp[n][0] for n in ("cls", "reg", "obj")], 0))
        head_b.append(jnp.concatenate([hp[n][1] for n in ("cls", "reg", "obj")], 0))
    Ctot = head_w[0].shape[0]

    poolT = make_pool_matrix(H, W)
    col = lambda v: v.reshape(-1, 1)  # biases as (C, 1) columns (lane broadcast)

    out0, out1 = pl.pallas_call(
        _deploy_fused_kernel,
        out_shape=(jax.ShapeDtypeStruct((N, Ctot, HW), jnp.float32),
                   jax.ShapeDtypeStruct((N, Ctot, HW4), jnp.float32)),
        grid=(N,),
        in_specs=[
            pl.BlockSpec((pl.Squeezed(), cin_p, HW), lambda n: (n, 0, 0)),
            pl.BlockSpec((CH, cin_p), lambda n: (0, 0)),
            pl.BlockSpec((CH, 1), lambda n: (0, 0)),
            pl.BlockSpec((CH, CH), lambda n: (0, 0)),
            pl.BlockSpec((CH, 1), lambda n: (0, 0)),
            pl.BlockSpec((CH, CH), lambda n: (0, 0)),
            pl.BlockSpec((CH, 1), lambda n: (0, 0)),
            pl.BlockSpec((Ctot, CH), lambda n: (0, 0)),
            pl.BlockSpec((Ctot, 1), lambda n: (0, 0)),
            pl.BlockSpec((Ctot, CH), lambda n: (0, 0)),
            pl.BlockSpec((Ctot, 1), lambda n: (0, 0)),
            pl.BlockSpec((HW, HW4), lambda n: (0, 0)),
        ],
        out_specs=(
            pl.BlockSpec((pl.Squeezed(), Ctot, HW), lambda n: (n, 0, 0)),
            pl.BlockSpec((pl.Squeezed(), Ctot, HW4), lambda n: (n, 0, 0)),
        ),
        compiler_params=pltpu.CompilerParams(dimension_semantics=("parallel",)),
    )(x, stem_w, col(params["stem_b"]),
      params["ca"][0]["w"], col(params["ca"][0]["b"]),
      params["ca"][1]["w"], col(params["ca"][1]["b"]),
      head_w[0], col(head_b[0]),
      head_w[1], col(head_b[1]),
      poolT)

    # Outputs are already channel-first; only free reshapes back to NCHW.
    return (out0.reshape(N, Ctot, H, W),
            out1.reshape(N, Ctot, H // 2, W // 2))


# ----------------------------------------------------------------------------
# Pure-JAX reference (same folded params) for correctness check
# ----------------------------------------------------------------------------
def reference_forward(x_nchw, params):
    hi = jax.lax.Precision.HIGHEST
    N, Cin, H, W = x_nchw.shape

    def conv1x1(t, w, b):  # t: (N, C, H, W), w: (Cout, Cin)
        return jnp.einsum("oc,nchw->nohw", w, t, precision=hi) + b[None, :, None, None]

    f = conv1x1(x_nchw.astype(jnp.float32), params["stem_w"], params["stem_b"])
    f = f * jax.nn.sigmoid(f)

    def ca(t, w, b):
        g = t.mean(axis=(2, 3), keepdims=True)  # forward_gvp
        return t * jax.nn.sigmoid(conv1x1(g, w, b))

    f0 = ca(f, params["ca"][0]["w"], params["ca"][0]["b"])
    f1 = f0.reshape(N, -1, H // 2, 2, W // 2, 2).mean(axis=(3, 5))
    f1 = ca(f1, params["ca"][1]["w"], params["ca"][1]["b"])

    outs = []
    for lvl, feat in enumerate([f0, f1]):
        hp = params["head"][lvl]
        branches = [conv1x1(feat, *hp[name]) for name in ("cls", "reg", "obj")]
        outs.append(jnp.concatenate(branches, axis=1))  # torch.cat(feats, dim=1)
    return tuple(outs)


if __name__ == "__main__":
    key = jax.random.PRNGKey(0)
    kx, kp = jax.random.split(key)

    N, Cin, H, W = 2, 4, 16, 16       # NCHW input like the torch module
    CH = 32                           # hidden channels
    num_classes, num_base_priors = 3, 1
    num_levels = 2

    x = jax.random.normal(kx, (N, Cin, H, W), jnp.float32)
    params = make_params(kp, Cin, CH, num_classes, num_base_priors, num_levels)

    outs = jax.block_until_ready(deploy_model_forward(x, params))
    refs = reference_forward(x, params)

    expected_c = num_base_priors * (num_classes + 5)
    assert outs[0].shape == (N, expected_c, H, W)
    assert outs[1].shape == (N, expected_c, H // 2, W // 2)
    for o, r in zip(outs, refs):
        assert jnp.allclose(o, r, atol=5e-3, rtol=5e-3), float(jnp.max(jnp.abs(o - r)))

    print("KERNEL_OK")
</pallas_src>

<mosaic_0001>
module attributes {stable_mosaic.version = 11 : i64} {
  func.func @_deploy_fused_kernel(%arg0: i32, %arg1: memref<1x8x256xf32, #tpu.memory_space<vmem>>, %arg2: memref<32x8xf32, #tpu.memory_space<vmem>>, %arg3: memref<32x1xf32, #tpu.memory_space<vmem>>, %arg4: memref<32x32xf32, #tpu.memory_space<vmem>>, %arg5: memref<32x1xf32, #tpu.memory_space<vmem>>, %arg6: memref<32x32xf32, #tpu.memory_space<vmem>>, %arg7: memref<32x1xf32, #tpu.memory_space<vmem>>, %arg8: memref<8x32xf32, #tpu.memory_space<vmem>>, %arg9: memref<8x1xf32, #tpu.memory_space<vmem>>, %arg10: memref<8x32xf32, #tpu.memory_space<vmem>>, %arg11: memref<8x1xf32, #tpu.memory_space<vmem>>, %arg12: memref<256x64xf32, #tpu.memory_space<vmem>>, %arg13: memref<1x8x256xf32, #tpu.memory_space<vmem>>, %arg14: memref<1x8x64xf32, #tpu.memory_space<vmem>>) attributes {dimension_semantics = [#tpu.dimension_semantics<parallel>], iteration_bounds = array<i64: 2>, scalar_prefetch = 0 : i64, scratch_operands = 0 : i64, tpu.core_type = #tpu.core_type<tc>, window_params = [{transform_indices = @transform_0, window_bounds = array<i64: 1, 8, 256>}, {pipeline_mode = #tpu.pipeline_mode<synchronous>, transform_indices = @transform_1, window_bounds = array<i64: 32, 8>}, {pipeline_mode = #tpu.pipeline_mode<synchronous>, transform_indices = @transform_2, window_bounds = array<i64: 32, 1>}, {pipeline_mode = #tpu.pipeline_mode<synchronous>, transform_indices = @transform_3, window_bounds = array<i64: 32, 32>}, {pipeline_mode = #tpu.pipeline_mode<synchronous>, transform_indices = @transform_4, window_bounds = array<i64: 32, 1>}, {pipeline_mode = #tpu.pipeline_mode<synchronous>, transform_indices = @transform_5, window_bounds = array<i64: 32, 32>}, {pipeline_mode = #tpu.pipeline_mode<synchronous>, transform_indices = @transform_6, window_bounds = array<i64: 32, 1>}, {pipeline_mode = #tpu.pipeline_mode<synchronous>, transform_indices = @transform_7, window_bounds = array<i64: 8, 32>}, {pipeline_mode = #tpu.pipeline_mode<synchronous>, transform_indices = @transform_8, window_bounds = array<i64: 8, 1>}, {pipeline_mode = #tpu.pipeline_mode<synchronous>, transform_indices = @transform_9, window_bounds = array<i64: 8, 32>}, {pipeline_mode = #tpu.pipeline_mode<synchronous>, transform_indices = @transform_10, window_bounds = array<i64: 8, 1>}, {pipeline_mode = #tpu.pipeline_mode<synchronous>, transform_indices = @transform_11, window_bounds = array<i64: 256, 64>}, {transform_indices = @transform_12, window_bounds = array<i64: 1, 8, 256>}, {transform_indices = @transform_13, window_bounds = array<i64: 1, 8, 64>}]} {
    %c0 = arith.constant 0 : index
    %c0_0 = arith.constant 0 : index
    %0 = vector.load %arg2[%c0, %c0_0] : memref<32x8xf32, #tpu.memory_space<vmem>>, vector<32x8xf32>
    %c0_1 = arith.constant 0 : index
    %c0_2 = arith.constant 0 : index
    %c0_3 = arith.constant 0 : index
    %1 = vector.load %arg1[%c0_1, %c0_2, %c0_3] : memref<1x8x256xf32, #tpu.memory_space<vmem>>, vector<1x8x256xf32>
    %2 = vector.shape_cast %1 : vector<1x8x256xf32> to vector<8x256xf32>
    %cst = arith.constant dense<0.000000e+00> : vector<32x256xf32>
    %3 = tpu.matmul %0, %2, %cst {dimension_numbers = #tpu.dot_dimension_numbers<[1], [0], [0], [1], [0, 0, 1, 1], [], []>} : vector<32x8xf32>, vector<8x256xf32>, vector<32x256xf32> -> vector<32x256xf32>
    %c0_4 = arith.constant 0 : index
    %c0_5 = arith.constant 0 : index
    %4 = vector.load %arg3[%c0_4, %c0_5] : memref<32x1xf32, #tpu.memory_space<vmem>>, vector<32x1xf32>
    %5 = vector.broadcast %4 : vector<32x1xf32> to vector<32x256xf32>
    %6 = arith.addf %3, %5 : vector<32x256xf32>
    %7 = arith.negf %6 : vector<32x256xf32>
    %8 = math.exp %7 : vector<32x256xf32>
    %cst_6 = arith.constant 1.000000e+00 : f32
    %9 = vector.broadcast %cst_6 : f32 to vector<32x256xf32>
    %10 = arith.addf %9, %8 : vector<32x256xf32>
    %11 = arith.divf %9, %10 : vector<32x256xf32>
    %12 = arith.mulf %6, %11 : vector<32x256xf32>
    %c0_7 = arith.constant 0 : index
    %c0_8 = arith.constant 0 : index
    %13 = vector.load %arg4[%c0_7, %c0_8] : memref<32x32xf32, #tpu.memory_space<vmem>>, vector<32x32xf32>
    %cst_9 = arith.constant dense<0.000000e+00> : vector<32x256xf32>
    %14 = tpu.matmul %13, %12, %cst_9 {dimension_numbers = #tpu.dot_dimension_numbers<[1], [0], [0], [1], [0, 0, 1, 1], [], []>} : vector<32x32xf32>, vector<32x256xf32>, vector<32x256xf32> -> vector<32x256xf32>
    %cst_10 = arith.constant dense<0.000000e+00> : vector<32xf32>
    %15 = vector.multi_reduction <add>, %14, %cst_10 [1] : vector<32x256xf32> to vector<32xf32>
    %16 = vector.shape_cast %15 : vector<32xf32> to vector<32x1xf32>
    %cst_11 = arith.constant 2.560000e+02 : f32
    %17 = vector.broadcast %cst_11 : f32 to vector<32x1xf32>
    %18 = arith.divf %16, %17 : vector<32x1xf32>
    %c0_12 = arith.constant 0 : index
    %c0_13 = arith.constant 0 : index
    %19 = vector.load %arg5[%c0_12, %c0_13] : memref<32x1xf32, #tpu.memory_space<vmem>>, vector<32x1xf32>
    %20 = arith.addf %18, %19 : vector<32x1xf32>
    %21 = arith.negf %20 : vector<32x1xf32>
    %22 = math.exp %21 : vector<32x1xf32>
    %cst_14 = arith.constant 1.000000e+00 : f32
    %23 = vector.broadcast %cst_14 : f32 to vector<32x1xf32>
    %24 = arith.addf %23, %22 : vector<32x1xf32>
    %25 = arith.divf %23, %24 : vector<32x1xf32>
    %26 = vector.broadcast %25 : vector<32x1xf32> to vector<32x256xf32>
    %27 = arith.mulf %12, %26 : vector<32x256xf32>
    %c0_15 = arith.constant 0 : index
    %c0_16 = arith.constant 0 : index
    %28 = vector.load %arg8[%c0_15, %c0_16] : memref<8x32xf32, #tpu.memory_space<vmem>>, vector<8x32xf32>
    %cst_17 = arith.constant dense<0.000000e+00> : vector<8x256xf32>
    %29 = tpu.matmul %28, %27, %cst_17 {dimension_numbers = #tpu.dot_dimension_numbers<[1], [0], [0], [1], [0, 0, 1, 1], [], []>} : vector<8x32xf32>, vector<32x256xf32>, vector<8x256xf32> -> vector<8x256xf32>
    %c0_18 = arith.constant 0 : index
    %c0_19 = arith.constant 0 : index
    %30 = vector.load %arg9[%c0_18, %c0_19] : memref<8x1xf32, #tpu.memory_space<vmem>>, vector<8x1xf32>
    %31 = vector.broadcast %30 : vector<8x1xf32> to vector<8x256xf32>
    %32 = arith.addf %29, %31 : vector<8x256xf32>
    %c0_20 = arith.constant 0 : index
    %c0_21 = arith.constant 0 : index
    %c0_22 = arith.constant 0 : index
    %33 = vector.load %arg13[%c0_20, %c0_21, %c0_22] : memref<1x8x256xf32, #tpu.memory_space<vmem>>, vector<1x8x256xf32>
    %34 = vector.shape_cast %33 : vector<1x8x256xf32> to vector<8x256xf32>
    %35 = vector.shape_cast %32 : vector<8x256xf32> to vector<1x8x256xf32>
    tpu.vector_store %arg13[%c0_20, %c0_21, %c0_22], %35 {strides = array<i32>} : memref<1x8x256xf32, #tpu.memory_space<vmem>>, vector<1x8x256xf32>,
    %c0_23 = arith.constant 0 : index
    %c0_24 = arith.constant 0 : index
    %36 = vector.load %arg12[%c0_23, %c0_24] : memref<256x64xf32, #tpu.memory_space<vmem>>, vector<256x64xf32>
    %cst_25 = arith.constant dense<0.000000e+00> : vector<32x64xf32>
    %37 = tpu.matmul %27, %36, %cst_25 {dimension_numbers = #tpu.dot_dimension_numbers<[1], [0], [0], [1], [0, 0, 1, 1], [], []>} : vector<32x256xf32>, vector<256x64xf32>, vector<32x64xf32> -> vector<32x64xf32>
    %c0_26 = arith.constant 0 : index
    %c0_27 = arith.constant 0 : index
    %38 = vector.load %arg6[%c0_26, %c0_27] : memref<32x32xf32, #tpu.memory_space<vmem>>, vector<32x32xf32>
    %cst_28 = arith.constant dense<0.000000e+00> : vector<32x64xf32>
    %39 = tpu.matmul %38, %37, %cst_28 {dimension_numbers = #tpu.dot_dimension_numbers<[1], [0], [0], [1], [0, 0, 1, 1], [], []>} : vector<32x32xf32>, vector<32x64xf32>, vector<32x64xf32> -> vector<32x64xf32>
    %cst_29 = arith.constant dense<0.000000e+00> : vector<32xf32>
    %40 = vector.multi_reduction <add>, %39, %cst_29 [1] : vector<32x64xf32> to vector<32xf32>
    %41 = vector.shape_cast %40 : vector<32xf32> to vector<32x1xf32>
    %cst_30 = arith.constant 6.400000e+01 : f32
    %42 = vector.broadcast %cst_30 : f32 to vector<32x1xf32>
    %43 = arith.divf %41, %42 : vector<32x1xf32>
    %c0_31 = arith.constant 0 : index
    %c0_32 = arith.constant 0 : index
    %44 = vector.load %arg7[%c0_31, %c0_32] : memref<32x1xf32, #tpu.memory_space<vmem>>, vector<32x1xf32>
    %45 = arith.addf %43, %44 : vector<32x1xf32>
    %46 = arith.negf %45 : vector<32x1xf32>
    %47 = math.exp %46 : vector<32x1xf32>
    %cst_33 = arith.constant 1.000000e+00 : f32
    %48 = vector.broadcast %cst_33 : f32 to vector<32x1xf32>
    %49 = arith.addf %48, %47 : vector<32x1xf32>
    %50 = arith.divf %48, %49 : vector<32x1xf32>
    %51 = vector.broadcast %50 : vector<32x1xf32> to vector<32x64xf32>
    %52 = arith.mulf %37, %51 : vector<32x64xf32>
    %c0_34 = arith.constant 0 : index
    %c0_35 = arith.constant 0 : index
    %53 = vector.load %arg10[%c0_34, %c0_35] : memref<8x32xf32, #tpu.memory_space<vmem>>, vector<8x32xf32>
    %cst_36 = arith.constant dense<0.000000e+00> : vector<8x64xf32>
    %54 = tpu.matmul %53, %52, %cst_36 {dimension_numbers = #tpu.dot_dimension_numbers<[1], [0], [0], [1], [0, 0, 1, 1], [], []>} : vector<8x32xf32>, vector<32x64xf32>, vector<8x64xf32> -> vector<8x64xf32>
    %c0_37 = arith.constant 0 : index
    %c0_38 = arith.constant 0 : index
    %55 = vector.load %arg11[%c0_37, %c0_38] : memref<8x1xf32, #tpu.memory_space<vmem>>, vector<8x1xf32>
    %56 = vector.broadcast %55 : vector<8x1xf32> to vector<8x64xf32>
    %57 = arith.addf %54, %56 : vector<8x64xf32>
    %c0_39 = arith.constant 0 : index
    %c0_40 = arith.constant 0 : index
    %c0_41 = arith.constant 0 : index
    %58 = vector.load %arg14[%c0_39, %c0_40, %c0_41] : memref<1x8x64xf32, #tpu.memory_space<vmem>>, vector<1x8x64xf32>
    %59 = vector.shape_cast %58 : vector<1x8x64xf32> to vector<8x64xf32>
    %60 = vector.shape_cast %57 : vector<8x64xf32> to vector<1x8x64xf32>
    tpu.vector_store %arg14[%c0_39, %c0_40, %c0_41], %60 {strides = array<i32>} : memref<1x8x64xf32, #tpu.memory_space<vmem>>, vector<1x8x64xf32>,
    return
  }
  func.func @transform_0(%arg0: i32) -> (i32, i32, i32) {
    %c0_i32 = arith.constant 0 : i32
    %c0_i32_0 = arith.constant 0 : i32
    %c0_i32_1 = arith.constant 0 : i32
    return %arg0, %c0_i32, %c0_i32_0 : i32, i32, i32
  }
  func.func @transform_1(%arg0: i32) -> (i32, i32) {
    %c0_i32 = arith.constant 0 : i32
    %c0_i32_0 = arith.constant 0 : i32
    %c0_i32_1 = arith.constant 0 : i32
    return %c0_i32, %c0_i32_0 : i32, i32
  }
  func.func @transform_2(%arg0: i32) -> (i32, i32) {
    %c0_i32 = arith.constant 0 : i32
    %c0_i32_0 = arith.constant 0 : i32
    %c0_i32_1 = arith.constant 0 : i32
    return %c0_i32, %c0_i32_0 : i32, i32
  }
  func.func @transform_3(%arg0: i32) -> (i32, i32) {
    %c0_i32 = arith.constant 0 : i32
    %c0_i32_0 = arith.constant 0 : i32
    %c0_i32_1 = arith.constant 0 : i32
    return %c0_i32, %c0_i32_0 : i32, i32
  }
  func.func @transform_4(%arg0: i32) -> (i32, i32) {
    %c0_i32 = arith.constant 0 : i32
    %c0_i32_0 = arith.constant 0 : i32
    %c0_i32_1 = arith.constant 0 : i32
    return %c0_i32, %c0_i32_0 : i32, i32
  }
  func.func @transform_5(%arg0: i32) -> (i32, i32) {
    %c0_i32 = arith.constant 0 : i32
    %c0_i32_0 = arith.constant 0 : i32
    %c0_i32_1 = arith.constant 0 : i32
    return %c0_i32, %c0_i32_0 : i32, i32
  }
  func.func @transform_6(%arg0: i32) -> (i32, i32) {
    %c0_i32 = arith.constant 0 : i32
    %c0_i32_0 = arith.constant 0 : i32
    %c0_i32_1 = arith.constant 0 : i32
    return %c0_i32, %c0_i32_0 : i32, i32
  }
  func.func @transform_7(%arg0: i32) -> (i32, i32) {
    %c0_i32 = arith.constant 0 : i32
    %c0_i32_0 = arith.constant 0 : i32
    %c0_i32_1 = arith.constant 0 : i32
    return %c0_i32, %c0_i32_0 : i32, i32
  }
  func.func @transform_8(%arg0: i32) -> (i32, i32) {
    %c0_i32 = arith.constant 0 : i32
    %c0_i32_0 = arith.constant 0 : i32
    %c0_i32_1 = arith.constant 0 : i32
    return %c0_i32, %c0_i32_0 : i32, i32
  }
  func.func @transform_9(%arg0: i32) -> (i32, i32) {
    %c0_i32 = arith.constant 0 : i32
    %c0_i32_0 = arith.constant 0 : i32
    %c0_i32_1 = arith.constant 0 : i32
    return %c0_i32, %c0_i32_0 : i32, i32
  }
  func.func @transform_10(%arg0: i32) -> (i32, i32) {
    %c0_i32 = arith.constant 0 : i32
    %c0_i32_0 = arith.constant 0 : i32
    %c0_i32_1 = arith.constant 0 : i32
    return %c0_i32, %c0_i32_0 : i32, i32
  }
  func.func @transform_11(%arg0: i32) -> (i32, i32) {
    %c0_i32 = arith.constant 0 : i32
    %c0_i32_0 = arith.constant 0 : i32
    %c0_i32_1 = arith.constant 0 : i32
    return %c0_i32, %c0_i32_0 : i32, i32
  }
  func.func @transform_12(%arg0: i32) -> (i32, i32, i32) {
    %c0_i32 = arith.constant 0 : i32
    %c0_i32_0 = arith.constant 0 : i32
    %c0_i32_1 = arith.constant 0 : i32
    return %arg0, %c0_i32, %c0_i32_0 : i32, i32, i32
  }
  func.func @transform_13(%arg0: i32) -> (i32, i32, i32) {
    %c0_i32 = arith.constant 0 : i32
    %c0_i32_0 = arith.constant 0 : i32
    %c0_i32_1 = arith.constant 0 : i32
    return %arg0, %c0_i32, %c0_i32_0 : i32, i32, i32
  }
}

</mosaic_0001>

<llo_original>
// kernel: tpu_custom_call.1
$region0: #{tpu_custom_call.1}
  #allocation0 [shape = 'u32[]', space=smem, size = 0x4, offset = 0x4, fixed_abs, tag = 'smem constant byte address 0x4 - core index']
  #allocation1 [shape = 'u32[144,128]{1,0:T(1,128)}', space=vmem, size = 0x12000, scoped, tag = 'internal scratch']
  %s0 = inlined_call_operand.vmem [shape: f32[2,8,256], index: 0, kind: input, shape index: {}]
  %s1 = inlined_call_operand.vmem [shape: f32[32,8], index: 1, kind: input, shape index: {}]
  %s2 = inlined_call_operand.vmem [shape: f32[32,1], index: 2, kind: input, shape index: {}]
  %s3 = inlined_call_operand.vmem [shape: f32[32,32], index: 3, kind: input, shape index: {}]
  %s4 = inlined_call_operand.vmem [shape: f32[32,1], index: 4, kind: input, shape index: {}]
  %s5 = inlined_call_operand.vmem [shape: f32[32,32], index: 5, kind: input, shape index: {}]
  %s6 = inlined_call_operand.vmem [shape: f32[32,1], index: 6, kind: input, shape index: {}]
  %s7 = inlined_call_operand.vmem [shape: f32[8,32], index: 7, kind: input, shape index: {}]
  %s8 = inlined_call_operand.vmem [shape: f32[8,1], index: 8, kind: input, shape index: {}]
  %s9 = inlined_call_operand.vmem [shape: f32[8,32], index: 9, kind: input, shape index: {}]
  %s10 = inlined_call_operand.vmem [shape: f32[8,1], index: 10, kind: input, shape index: {}]
  %s11 = inlined_call_operand.vmem [shape: f32[256,64], index: 11, kind: input, shape index: {}]
  %s12 = inlined_call_operand.hbm [shape: f32[2,8,256], index: 12, kind: output, shape index: {0}]
  %s13 = inlined_call_operand.hbm [shape: f32[2,8,64], index: 13, kind: output, shape index: {1}]
  %14 = xla_tuple %s12, %s13
  %s15 = sld [smem:[#allocation0]]
  $region89: #{tpu_custom_call.1} parent=0
    _
  %s17 = ssub.s32 1, %s15
  %s18 = scalar_select 0, %s17, %s15
  $region1: #{tpu_custom_call.1} parent=0
    #allocation2 [shape = 'u8[16384]{0}', space=vmem, size = 0x4000, scoped, tag = 'output window, operand 0']
    #allocation3 [shape = 's32[2]{0}', space=sflag, size = 0x8, scoped, tag = 'scoped memory for tpu_custom_call.1']
    #allocation4 [shape = 'u8[8192]{0}', space=vmem, size = 0x2000, scoped, tag = 'output window, operand 1']
    #allocation5 [shape = 's32[2]{0}', space=sflag, size = 0x8, scoped, tag = 'scoped memory for tpu_custom_call.1']
    %19 = vsyncpa [#allocation3], 0
    %s20 = scalar_lea.sflag [#allocation3], 1
    %21 = vsyncpa %s20, 0
    %22 = vsyncpa [#allocation5], 0
    %s23 = scalar_lea.sflag [#allocation5], 1
    %24 = vsyncpa %s23, 0
    loop: start=0, step=1, limit=4
    $region2: #{tpu_custom_call.1} parent=1 // loop_pre_header
      _
    $region3: #{tpu_custom_call.1} parent=1 // loop_header
      %s26 = sphi 0, %s30
      %p27 = scmp.ge.s32.totalorder %s26, 4
      %s36 = sphi 0, %s38
      %s39 = sphi 0, %s36
      %s40 = sphi 0, %s39
      %s56 = sphi 0, %s40
      %s60 = sphi 0, %s60
      %s62 = sphi 0, %s60
      %s63 = sphi 0, %s62
      %s77 = sphi 0, %s63
      %s81 = sphi 0, %s81
      %s83 = sphi 0, %s81
      %s84 = sphi 0, %s83
      %s98 = sphi 0, %s84
      %s102 = sphi 0, %s102
      %s104 = sphi 0, %s102
      %s105 = sphi 0, %s104
      %s119 = sphi 0, %s105
      %s123 = sphi 0, %s123
      %s125 = sphi 0, %s123
      %s126 = sphi 0, %s125
      %s140 = sphi 0, %s126
      %s144 = sphi 0, %s144
      %s146 = sphi 0, %s144
      %s147 = sphi 0, %s146
      %s161 = sphi 0, %s147
      %s165 = sphi 0, %s165
      %s167 = sphi 0, %s165
      %s168 = sphi 0, %s167
      %s182 = sphi 0, %s168
      %s186 = sphi 0, %s186
      %s188 = sphi 0, %s186
      %s189 = sphi 0, %s188
      %s203 = sphi 0, %s189
      %s207 = sphi 0, %s207
      %s209 = sphi 0, %s207
      %s210 = sphi 0, %s209
      %s224 = sphi 0, %s210
      %s228 = sphi 0, %s228
      %s230 = sphi 0, %s228
      %s231 = sphi 0, %s230
      %s245 = sphi 0, %s231
      %s249 = sphi 0, %s249
      %s251 = sphi 0, %s249
      %s252 = sphi 0, %s251
      %s266 = sphi 0, %s252
      %s270 = sphi 0, %s270
      %s272 = sphi 0, %s270
      %s273 = sphi 0, %s272
      %s287 = sphi 0, %s273
      %s293 = sphi 0, %s295
      %s296 = sphi 0, %s293
      %s297 = sphi 0, %s296
      %s313 = sphi 0, %s297
      %s319 = sphi 0, %s321
      %s322 = sphi 0, %s319
      %s323 = sphi 0, %s322
      %s339 = sphi 0, %s323
    $region4: #{tpu_custom_call.1} parent=1 // loop_header_branch
      %29 = sbr.rel (%p27) target = $region8
    $region5: #{tpu_custom_call.1} parent=1 // loop_body
      %s31 = ssub.s32 %s26, 1
      %s32 = ssub.s32 %s26, 2
      %s33 = sadd.s32 %s26, 1
      %s34 = ssub.s32 %s26, %s33
      %p35 = scmp.eq.s32.totalorder %s34, 0
      %s37 = sadd.s32 %s36, 1
      %s38 = scalar_select %p35, %s36, %s37
      %p41 = pneg %p35
      %p42 = scmp.eq.s32.totalorder %s26, 1
      %p43 = por %p41, %p42
      %p44 = scmp.ne.s32.totalorder %s36, %s39
      %p45 = scmp.eq.s32.totalorder %s26, 0
      %p46 = por %p44, %p45
      %p47 = scmp.ne.s32.totalorder %s36, %s39
      %p48 = scmp.eq.s32.totalorder %s31, 1
      %p49 = por %p47, %p48
      %p50 = scmp.ne.s32.totalorder %s39, %s40
      %p51 = scmp.eq.s32.totalorder %s31, 0
      %p52 = por %p50, %p51
      %p53 = scmp.ne.s32.totalorder %s39, %s40
      %p54 = scmp.eq.s32.totalorder %s32, 1
      %p55 = por %p53, %p54
      %p57 = scmp.ne.s32.totalorder %s40, %s56
      %p58 = scmp.eq.s32.totalorder %s32, 0
      %p59 = por %p57, %p58
      %s61 = sadd.s32 %s60, 1
      %p64 = scmp.eq.s32.totalorder %s26, 1
      %p65 = scmp.ne.s32.totalorder %s60, %s62
      %p66 = scmp.eq.s32.totalorder %s26, 0
      %p67 = por %p65, %p66
      %p68 = scmp.ne.s32.totalorder %s60, %s62
      %p69 = scmp.eq.s32.totalorder %s31, 1
      %p70 = por %p68, %p69
      %p71 = scmp.ne.s32.totalorder %s62, %s63
      %p72 = scmp.eq.s32.totalorder %s31, 0
      %p73 = por %p71, %p72
      %p74 = scmp.ne.s32.totalorder %s62, %s63
      %p75 = scmp.eq.s32.totalorder %s32, 1
      %p76 = por %p74, %p75
      %p78 = scmp.ne.s32.totalorder %s63, %s77
      %p79 = scmp.eq.s32.totalorder %s32, 0
      %p80 = por %p78, %p79
      %s82 = sadd.s32 %s81, 1
      %p85 = scmp.eq.s32.totalorder %s26, 1
      %p86 = scmp.ne.s32.totalorder %s81, %s83
      %p87 = scmp.eq.s32.totalorder %s26, 0
      %p88 = por %p86, %p87
      %p89 = scmp.ne.s32.totalorder %s81, %s83
      %p90 = scmp.eq.s32.totalorder %s31, 1
      %p91 = por %p89, %p90
      %p92 = scmp.ne.s32.totalorder %s83, %s84
      %p93 = scmp.eq.s32.totalorder %s31, 0
      %p94 = por %p92, %p93
      %p95 = scmp.ne.s32.totalorder %s83, %s84
      %p96 = scmp.eq.s32.totalorder %s32, 1
      %p97 = por %p95, %p96
      %p99 = scmp.ne.s32.totalorder %s84, %s98
      %p100 = scmp.eq.s32.totalorder %s32, 0
      %p101 = por %p99, %p100
      %s103 = sadd.s32 %s102, 1
      %p106 = scmp.eq.s32.totalorder %s26, 1
      %p107 = scmp.ne.s32.totalorder %s102, %s104
      %p108 = scmp.eq.s32.totalorder %s26, 0
      %p109 = por %p107, %p108
      %p110 = scmp.ne.s32.totalorder %s102, %s104
      %p111 = scmp.eq.s32.totalorder %s31, 1
      %p112 = por %p110, %p111
      %p113 = scmp.ne.s32.totalorder %s104, %s105
      %p114 = scmp.eq.s32.totalorder %s31, 0
      %p115 = por %p113, %p114
      %p116 = scmp.ne.s32.totalorder %s104, %s105
      %p117 = scmp.eq.s32.totalorder %s32, 1
      %p118 = por %p116, %p117
      %p120 = scmp.ne.s32.totalorder %s105, %s119
      %p121 = scmp.eq.s32.totalorder %s32, 0
      %p122 = por %p120, %p121
      %s124 = sadd.s32 %s123, 1
      %p127 = scmp.eq.s32.totalorder %s26, 1
      %p128 = scmp.ne.s32.totalorder %s123, %s125
      %p129 = scmp.eq.s32.totalorder %s26, 0
      %p130 = por %p128, %p129
      %p131 = scmp.ne.s32.totalorder %s123, %s125
      %p132 = scmp.eq.s32.totalorder %s31, 1
      %p133 = por %p131, %p132
      %p134 = scmp.ne.s32.totalorder %s125, %s126
      %p135 = scmp.eq.s32.totalorder %s31, 0
      %p136 = por %p134, %p135
      %p137 = scmp.ne.s32.totalorder %s125, %s126
      %p138 = scmp.eq.s32.totalorder %s32, 1
      %p139 = por %p137, %p138
      %p141 = scmp.ne.s32.totalorder %s126, %s140
      %p142 = scmp.eq.s32.totalorder %s32, 0
      %p143 = por %p141, %p142
      %s145 = sadd.s32 %s144, 1
      %p148 = scmp.eq.s32.totalorder %s26, 1
      %p149 = scmp.ne.s32.totalorder %s144, %s146
      %p150 = scmp.eq.s32.totalorder %s26, 0
      %p151 = por %p149, %p150
      %p152 = scmp.ne.s32.totalorder %s144, %s146
      %p153 = scmp.eq.s32.totalorder %s31, 1
      %p154 = por %p152, %p153
      %p155 = scmp.ne.s32.totalorder %s146, %s147
      %p156 = scmp.eq.s32.totalorder %s31, 0
      %p157 = por %p155, %p156
      %p158 = scmp.ne.s32.totalorder %s146, %s147
      %p159 = scmp.eq.s32.totalorder %s32, 1
      %p160 = por %p158, %p159
      %p162 = scmp.ne.s32.totalorder %s147, %s161
      %p163 = scmp.eq.s32.totalorder %s32, 0
      %p164 = por %p162, %p163
      %s166 = sadd.s32 %s165, 1
      %p169 = scmp.eq.s32.totalorder %s26, 1
      %p170 = scmp.ne.s32.totalorder %s165, %s167
      %p171 = scmp.eq.s32.totalorder %s26, 0
      %p172 = por %p170, %p171
      %p173 = scmp.ne.s32.totalorder %s165, %s167
      %p174 = scmp.eq.s32.totalorder %s31, 1
      %p175 = por %p173, %p174
      %p176 = scmp.ne.s32.totalorder %s167, %s168
      %p177 = scmp.eq.s32.totalorder %s31, 0
      %p178 = por %p176, %p177
      %p179 = scmp.ne.s32.totalorder %s167, %s168
      %p180 = scmp.eq.s32.totalorder %s32, 1
      %p181 = por %p179, %p180
      %p183 = scmp.ne.s32.totalorder %s168, %s182
      %p184 = scmp.eq.s32.totalorder %s32, 0
      %p185 = por %p183, %p184
      %s187 = sadd.s32 %s186, 1
      %p190 = scmp.eq.s32.totalorder %s26, 1
      %p191 = scmp.ne.s32.totalorder %s186, %s188
      %p192 = scmp.eq.s32.totalorder %s26, 0
      %p193 = por %p191, %p192
      %p194 = scmp.ne.s32.totalorder %s186, %s188
      %p195 = scmp.eq.s32.totalorder %s31, 1
      %p196 = por %p194, %p195
      %p197 = scmp.ne.s32.totalorder %s188, %s189
      %p198 = scmp.eq.s32.totalorder %s31, 0
      %p199 = por %p197, %p198
      %p200 = scmp.ne.s32.totalorder %s188, %s189
      %p201 = scmp.eq.s32.totalorder %s32, 1
      %p202 = por %p200, %p201
      %p204 = scmp.ne.s32.totalorder %s189, %s203
      %p205 = scmp.eq.s32.totalorder %s32, 0
      %p206 = por %p204, %p205
      %s208 = sadd.s32 %s207, 1
      %p211 = scmp.eq.s32.totalorder %s26, 1
      %p212 = scmp.ne.s32.totalorder %s207, %s209
      %p213 = scmp.eq.s32.totalorder %s26, 0
      %p214 = por %p212, %p213
      %p215 = scmp.ne.s32.totalorder %s207, %s209
      %p216 = scmp.eq.s32.totalorder %s31, 1
      %p217 = por %p215, %p216
      %p218 = scmp.ne.s32.totalorder %s209, %s210
      %p219 = scmp.eq.s32.totalorder %s31, 0
      %p220 = por %p218, %p219
      %p221 = scmp.ne.s32.totalorder %s209, %s210
      %p222 = scmp.eq.s32.totalorder %s32, 1
      %p223 = por %p221, %p222
      %p225 = scmp.ne.s32.totalorder %s210, %s224
      %p226 = scmp.eq.s32.totalorder %s32, 0
      %p227 = por %p225, %p226
      %s229 = sadd.s32 %s228, 1
      %p232 = scmp.eq.s32.totalorder %s26, 1
      %p233 = scmp.ne.s32.totalorder %s228, %s230
      %p234 = scmp.eq.s32.totalorder %s26, 0
      %p235 = por %p233, %p234
      %p236 = scmp.ne.s32.totalorder %s228, %s230
      %p237 = scmp.eq.s32.totalorder %s31, 1
      %p238 = por %p236, %p237
      %p239 = scmp.ne.s32.totalorder %s230, %s231
      %p240 = scmp.eq.s32.totalorder %s31, 0
      %p241 = por %p239, %p240
      %p242 = scmp.ne.s32.totalorder %s230, %s231
      %p243 = scmp.eq.s32.totalorder %s32, 1
      %p244 = por %p242, %p243
      %p246 = scmp.ne.s32.totalorder %s231, %s245
      %p247 = scmp.eq.s32.totalorder %s32, 0
      %p248 = por %p246, %p247
      %s250 = sadd.s32 %s249, 1
      %p253 = scmp.eq.s32.totalorder %s26, 1
      %p254 = scmp.ne.s32.totalorder %s249, %s251
      %p255 = scmp.eq.s32.totalorder %s26, 0
      %p256 = por %p254, %p255
      %p257 = scmp.ne.s32.totalorder %s249, %s251
      %p258 = scmp.eq.s32.totalorder %s31, 1
      %p259 = por %p257, %p258
      %p260 = scmp.ne.s32.totalorder %s251, %s252
      %p261 = scmp.eq.s32.totalorder %s31, 0
      %p262 = por %p260, %p261
      %p263 = scmp.ne.s32.totalorder %s251, %s252
      %p264 = scmp.eq.s32.totalorder %s32, 1
      %p265 = por %p263, %p264
      %p267 = scmp.ne.s32.totalorder %s252, %s266
      %p268 = scmp.eq.s32.totalorder %s32, 0
      %p269 = por %p267, %p268
      %s271 = sadd.s32 %s270, 1
      %p274 = scmp.eq.s32.totalorder %s26, 1
      %p275 = scmp.ne.s32.totalorder %s270, %s272
      %p276 = scmp.eq.s32.totalorder %s26, 0
      %p277 = por %p275, %p276
      %p278 = scmp.ne.s32.totalorder %s270, %s272
      %p279 = scmp.eq.s32.totalorder %s31, 1
      %p280 = por %p278, %p279
      %p281 = scmp.ne.s32.totalorder %s272, %s273
      %p282 = scmp.eq.s32.totalorder %s31, 0
      %p283 = por %p281, %p282
      %p284 = scmp.ne.s32.totalorder %s272, %s273
      %p285 = scmp.eq.s32.totalorder %s32, 1
      %p286 = por %p284, %p285
      %p288 = scmp.ne.s32.totalorder %s273, %s287
      %p289 = scmp.eq.s32.totalorder %s32, 0
      %p290 = por %p288, %p289
      %s291 = ssub.s32 %s26, %s33
      %p292 = scmp.eq.s32.totalorder %s291, 0
      %s294 = sadd.s32 %s293, 1
      %s295 = scalar_select %p292, %s293, %s294
      %p298 = pneg %p292
      %p299 = scmp.eq.s32.totalorder %s26, 1
      %p300 = por %p298, %p299
      %p301 = scmp.ne.s32.totalorder %s293, %s296
      %p302 = scmp.eq.s32.totalorder %s26, 0
      %p303 = por %p301, %p302
      %p304 = scmp.ne.s32.totalorder %s293, %s296
      %p305 = scmp.eq.s32.totalorder %s31, 1
      %p306 = por %p304, %p305
      %p307 = scmp.ne.s32.totalorder %s296, %s297
      %p308 = scmp.eq.s32.totalorder %s31, 0
      %p309 = por %p307, %p308
      %p310 = scmp.ne.s32.totalorder %s296, %s297
      %p311 = scmp.eq.s32.totalorder %s32, 1
      %p312 = por %p310, %p311
      %p314 = scmp.ne.s32.totalorder %s297, %s313
      %p315 = scmp.eq.s32.totalorder %s32, 0
      %p316 = por %p314, %p315
      %s317 = ssub.s32 %s26, %s33
      %p318 = scmp.eq.s32.totalorder %s317, 0
      %s320 = sadd.s32 %s319, 1
      %s321 = scalar_select %p318, %s319, %s320
      %p324 = pneg %p318
      %p325 = scmp.eq.s32.totalorder %s26, 1
      %p326 = por %p324, %p325
      %p327 = scmp.ne.s32.totalorder %s319, %s322
      %p328 = scmp.eq.s32.totalorder %s26, 0
      %p329 = por %p327, %p328
      %p330 = scmp.ne.s32.totalorder %s319, %s322
      %p331 = scmp.eq.s32.totalorder %s31, 1
      %p332 = por %p330, %p331
      %p333 = scmp.ne.s32.totalorder %s322, %s323
      %p334 = scmp.eq.s32.totalorder %s31, 0
      %p335 = por %p333, %p334
      %p336 = scmp.ne.s32.totalorder %s322, %s323
      %p337 = scmp.eq.s32.totalorder %s32, 1
      %p338 = por %p336, %p337
      %p340 = scmp.ne.s32.totalorder %s323, %s339
      %p341 = scmp.eq.s32.totalorder %s32, 0
      %p342 = por %p340, %p341
      %p343 = scmp.le.s32.totalorder 1, %s26
      %p344 = scmp.lt.s32.totalorder %s26, 3
      %p345 = pnand %p343, %p344
      %p346 = pneg %p345
      // Predicated region
      $region9: #{tpu_custom_call.1} parent=5 // pred_check
        _
      $region10: #{tpu_custom_call.1} parent=5 // pred_check_branch
        %348 = sbr.rel (%p345) target = $region12
      $region11: #{tpu_custom_call.1} parent=5 // pred_region
        %s349 = ssub.s32 %s26, 1
        // Predicated region
        $region13: #{tpu_custom_call.1} parent=11 // pred_check
          %p350 = pneg %p73
        $region14: #{tpu_custom_call.1} parent=11 // pred_check_branch
          %352 = sbr.rel (%p350) target = $region16
        $region15: #{tpu_custom_call.1} parent=11 // pred_region
          _
        $region16: #{tpu_custom_call.1} parent=11 // pred_fallthru
          _
        // Predicated region
        $region17: #{tpu_custom_call.1} parent=11 // pred_check
          %p353 = pneg %p94
        $region18: #{tpu_custom_call.1} parent=11 // pred_check_branch
          %355 = sbr.rel (%p353) target = $region20
        $region19: #{tpu_custom_call.1} parent=11 // pred_region
          _
        $region20: #{tpu_custom_call.1} parent=11 // pred_fallthru
          _
        // Predicated region
        $region21: #{tpu_custom_call.1} parent=11 // pred_check
          %p356 = pneg %p115
        $region22: #{tpu_custom_call.1} parent=11 // pred_check_branch
          %358 = sbr.rel (%p356) target = $region24
        $region23: #{tpu_custom_call.1} parent=11 // pred_region
          _
        $region24: #{tpu_custom_call.1} parent=11 // pred_fallthru
          _
        // Predicated region
        $region25: #{tpu_custom_call.1} parent=11 // pred_check
          %p359 = pneg %p136
        $region26: #{tpu_custom_call.1} parent=11 // pred_check_branch
          %361 = sbr.rel (%p359) target = $region28
        $region27: #{tpu_custom_call.1} parent=11 // pred_region
          _
        $region28: #{tpu_custom_call.1} parent=11 // pred_fallthru
          _
        // Predicated region
        $region29: #{tpu_custom_call.1} parent=11 // pred_check
          %p362 = pneg %p157
        $region30: #{tpu_custom_call.1} parent=11 // pred_check_branch
          %364 = sbr.rel (%p362) target = $region32
        $region31: #{tpu_custom_call.1} parent=11 // pred_region
          _
        $region32: #{tpu_custom_call.1} parent=11 // pred_fallthru
          _
        // Predicated region
        $region33: #{tpu_custom_call.1} parent=11 // pred_check
          %p365 = pneg %p178
        $region34: #{tpu_custom_call.1} parent=11 // pred_check_branch
          %367 = sbr.rel (%p365) target = $region36
        $region35: #{tpu_custom_call.1} parent=11 // pred_region
          _
        $region36: #{tpu_custom_call.1} parent=11 // pred_fallthru
          _
        // Predicated region
        $region37: #{tpu_custom_call.1} parent=11 // pred_check
          %p368 = pneg %p199
        $region38: #{tpu_custom_call.1} parent=11 // pred_check_branch
          %370 = sbr.rel (%p368) target = $region40
        $region39: #{tpu_custom_call.1} parent=11 // pred_region
          _
        $region40: #{tpu_custom_call.1} parent=11 // pred_fallthru
          _
        // Predicated region
        $region41: #{tpu_custom_call.1} parent=11 // pred_check
          %p371 = pneg %p220
        $region42: #{tpu_custom_call.1} parent=11 // pred_check_branch
          %373 = sbr.rel (%p371) target = $region44
        $region43: #{tpu_custom_call.1} parent=11 // pred_region
          _
        $region44: #{tpu_custom_call.1} parent=11 // pred_fallthru
          _
        // Predicated region
        $region45: #{tpu_custom_call.1} parent=11 // pred_check
          %p374 = pneg %p241
        $region46: #{tpu_custom_call.1} parent=11 // pred_check_branch
          %376 = sbr.rel (%p374) target = $region48
        $region47: #{tpu_custom_call.1} parent=11 // pred_region
          _
        $region48: #{tpu_custom_call.1} parent=11 // pred_fallthru
          _
        // Predicated region
        $region49: #{tpu_custom_call.1} parent=11 // pred_check
          %p377 = pneg %p262
        $region50: #{tpu_custom_call.1} parent=11 // pred_check_branch
          %379 = sbr.rel (%p377) target = $region52
        $region51: #{tpu_custom_call.1} parent=11 // pred_region
          _
        $region52: #{tpu_custom_call.1} parent=11 // pred_fallthru
          _
        // Predicated region
        $region53: #{tpu_custom_call.1} parent=11 // pred_check
          %p380 = pneg %p283
        $region54: #{tpu_custom_call.1} parent=11 // pred_check_branch
          %382 = sbr.rel (%p380) target = $region56
        $region55: #{tpu_custom_call.1} parent=11 // pred_region
          _
        $region56: #{tpu_custom_call.1} parent=11 // pred_fallthru
          _
      $region12: #{tpu_custom_call.1} parent=5 // pred_fallthru
        _
      %p383 = scmp.lt.s32.totalorder %s26, 2
      // Predicated region
      $region57: #{tpu_custom_call.1} parent=5 // pred_check
        %p384 = pneg %p383
      $region58: #{tpu_custom_call.1} parent=5 // pred_check_branch
        %386 = sbr.rel (%p384) target = $region60
      $region59: #{tpu_custom_call.1} parent=5 // pred_region
        // Predicated region
        $region61: #{tpu_custom_call.1} parent=59 // pred_check
          %p387 = pneg %p46
        $region62: #{tpu_custom_call.1} parent=59 // pred_check_branch
          %389 = sbr.rel (%p387) target = $region64
        $region63: #{tpu_custom_call.1} parent=59 // pred_region
          %p390 = scmp.lt.s32.totalorder %s26, 1
          %s391 = scalar_select %p390, %s26, 1
          %s392 = smul.addr %s391, 2
          %s393 = smul.addr %s392, 8
          %s394 = scalar_lea.vmem %s0, %s393
        $region64: #{tpu_custom_call.1} parent=59 // pred_fallthru
          _
      $region60: #{tpu_custom_call.1} parent=5 // pred_fallthru
        _
      %p395 = scmp.le.s32.totalorder 1, %s26
      %p396 = scmp.lt.s32.totalorder %s26, 3
      %p397 = pnand %p395, %p396
      %p398 = pneg %p397
      // Predicated region
      $region65: #{tpu_custom_call.1} parent=5 // pred_check
        _
      $region66: #{tpu_custom_call.1} parent=5 // pred_check_branch
        %400 = sbr.rel (%p397) target = $region68
      $region67: #{tpu_custom_call.1} parent=5 // pred_region
        %s401 = ssub.s32 %s26, 1
        %p402 = scmp.lt.s32.totalorder %s31, 1
        %s403 = scalar_select %p402, %s31, 1
        %s404 = smul.addr %s403, 2
        %s405 = smul.addr %s404, 8
        %s406 = scalar_lea.vmem %s0, %s405
        %p407 = pneg %p52
        %p408 = pneg %p49
        %p409 = pneg %p73
        %p410 = pneg %p70
        %p411 = pneg %p94
        %p412 = pneg %p91
        %p413 = pneg %p115
        %p414 = pneg %p112
        %p415 = pneg %p136
        %p416 = pneg %p133
        %p417 = pneg %p157
        %p418 = pneg %p154
        %p419 = pneg %p178
        %p420 = pneg %p175
        %p421 = pneg %p199
        %p422 = pneg %p196
        %p423 = pneg %p220
        %p424 = pneg %p217
        %p425 = pneg %p241
        %p426 = pneg %p238
        %p427 = pneg %p262
        %p428 = pneg %p259
        %p429 = pneg %p283
        %p430 = pneg %p280
        %p431 = pneg %p309
        %p432 = pneg %p306
        %s433 = sand.u32 %s296, 1
        %s434 = scalar_lea.sflag [#allocation3], %s433
        %s435 = sand.u32 %s296, 1
        %s436 = smul.addr %s435, 16
        %s437 = scalar_lea.vmem [#allocation2], %s436
        %p438 = pneg %p335
        %p439 = pneg %p332
        %s440 = sand.u32 %s322, 1
        %s441 = scalar_lea.sflag [#allocation5], %s440
        %s442 = sand.u32 %s322, 1
        %s443 = smul.addr %s442, 8
        %s444 = scalar_lea.vmem [#allocation4], %s443
        %p445 = scmp.lt.s32.totalorder %s31, 1
        %s446 = scalar_select %p445, %s31, 1
        %s447 = smul.addr %s446, 2
        %s448 = smul.addr %s447, 8
        %s449 = scalar_lea.vmem %s0, %s448
        %v450 = vld [vmem:[%s1] sm:$0xff]
        %v451 = vld [vmem:[%s1 + $0x8] sm:$0xff]
        %v452 = vld [vmem:[%s1 + $0x10] sm:$0xff]
        %v453 = vld [vmem:[%s1 + $0x18] sm:$0xff]
        %v454 = vld [vmem:[%s449] sm:$0xff]
        %v455 = vld [vmem:[%s449 + $0x8] sm:$0xff]
        %v456 = vld [vmem:[%s2] sm:$0xff]
        %v457 = vld [vmem:[%s2 + $0x8] sm:$0xff]
        %v458 = vld [vmem:[%s2 + $0x10] sm:$0xff]
        %v459 = vld [vmem:[%s2 + $0x18] sm:$0xff]
        %461 = vset.pattern.permute.xlu0 0
        %462 = vperm.xlu0 %461, %v456
        %v463 = vpop.permute.xlu0 %462
        %466 = vset.pattern.permute.xlu0 0
        %467 = vperm.xlu0 %466, %v457
        %v468 = vpop.permute.xlu0 %467
        %471 = vset.pattern.permute.xlu0 0
        %472 = vperm.xlu0 %471, %v458
        %v473 = vpop.permute.xlu0 %472
        %476 = vset.pattern.permute.xlu0 0
        %477 = vperm.xlu0 %476, %v459
        %v478 = vpop.permute.xlu0 %477
        %vm480 = vcmask 64512
        %v482 = vsel %vm480, %v450, 0
        %v485 = vsel %vm480, %v451, 0
        %v488 = vsel %vm480, %v452, 0
        %v491 = vsel %vm480, %v453, 0
        %493 = vmatprep.subr.mxu0 %v455
        %494 = vmatpush1.msra.mxu0 %v454
        %495 = vmatprep.subr.mxu0 0.0
        %496 = vmatpush1.msra.mxu0 0.0
        %497 = vmatprep.subr.mxu0 0.0
        %498 = vmatpush1.msra.mxu0 0.0
        %499 = vmatprep.subr.mxu0 0.0
        %500 = vmatpush1.msra.mxu0 0.0
        %501 = vmatprep.subr.mxu0 0.0
        %502 = vmatpush1.msra.mxu0 0.0
        %503 = vmatprep.subr.mxu0 0.0
        %504 = vmatpush1.msra.mxu0 0.0
        %505 = vmatprep.subr.mxu0 0.0
        %506 = vmatpush1.msra.mxu0 0.0
        %507 = vmatprep.subr.mxu0 0.0
        %508 = vmatpush1.msra.mxu0 0.0
        %509 = vmatprep.subr.mxu0 0.0
        %510 = vmatpush1.msra.mxu0 0.0
        %511 = vmatprep.subr.mxu0 0.0
        %512 = vmatpush1.msra.mxu0 0.0
        %513 = vmatprep.subr.mxu0 0.0
        %514 = vmatpush1.msra.mxu0 0.0
        %515 = vmatprep.subr.mxu0 0.0
        %516 = vmatpush1.msra.mxu0 0.0
        %517 = vmatprep.subr.mxu0 0.0
        %518 = vmatpush1.msra.mxu0 0.0
        %519 = vmatprep.subr.mxu0 0.0
        %520 = vmatpush1.msra.mxu0 0.0
        %521 = vmatprep.subr.mxu0 0.0
        %522 = vmatpush1.msra.mxu0 0.0
        %523 = vmatprep.subr.mxu0 0.0
        %524 = vmatpush1.msra.mxu0 0.0
        %525 = vmatprep.subr.mxu0 0.0
        %526 = vmatpush1.msra.mxu0 0.0
        %527 = vmatprep.subr.mxu0 0.0
        %528 = vmatpush1.msra.mxu0 0.0
        %529 = vmatprep.subr.mxu0 0.0
        %530 = vmatpush1.msra.mxu0 0.0
        %531 = vmatprep.subr.mxu0 0.0
        %532 = vmatpush1.msra.mxu0 0.0
        %533 = vmatprep.subr.mxu0 0.0
        %534 = vmatpush1.msra.mxu0 0.0
        %535 = vmatprep.subr.mxu0 0.0
        %536 = vmatpush1.msra.mxu0 0.0
        %537 = vmatprep.subr.mxu0 0.0
        %538 = vmatpush1.msra.mxu0 0.0
        %539 = vmatprep.subr.mxu0 0.0
        %540 = vmatpush1.msra.mxu0 0.0
        %541 = vmatprep.subr.mxu0 0.0
        %542 = vmatpush1.msra.mxu0 0.0
        %543 = vmatprep.subr.mxu0 0.0
        %544 = vmatpush1.msra.mxu0 0.0
        %545 = vmatprep.subr.mxu0 0.0
        %546 = vmatpush1.msra.mxu0 0.0
        %547 = vmatprep.subr.mxu0 0.0
        %548 = vmatpush1.msra.mxu0 0.0
        %549 = vmatprep.subr.mxu0 0.0
        %550 = vmatpush1.msra.mxu0 0.0
        %551 = vmatprep.subr.mxu0 0.0
        %552 = vmatpush1.msra.mxu0 0.0
        %553 = vmatprep.subr.mxu0 0.0
        %554 = vmatpush1.msra.mxu0 0.0
        %555 = vmatprep.subr.mxu0 0.0
        %556 = vmatpush1.msra.mxu0 0.0
        %557 = vmatprep.mubr.f32.mxu0 0.0
        %558 = vmatmul.mubr.f32.gmra.mrb[0].mxu0 %v482
        %v559 = vpop.f32.mrb[0].mxu0
        %v560 = vadd.f32 %v463, %v559
        %v561 = vpop.f32.mrb[0].mxu0
        %v562 = vadd.f32 %v463, %v561
        %563 = vmatprep.mubr.f32.mxu0 0.0
        %564 = vmatmul.mubr.f32.gmra.mrb[0].mxu0 %v485
        %v565 = vpop.f32.mrb[0].mxu0
        %v566 = vadd.f32 %v468, %v565
        %v567 = vpop.f32.mrb[0].mxu0
        %v568 = vadd.f32 %v468, %v567
        %569 = vmatprep.mubr.f32.mxu0 0.0
        %570 = vmatmul.mubr.f32.gmra.mrb[0].mxu0 %v488
        %v571 = vpop.f32.mrb[0].mxu0
        %v572 = vadd.f32 %v473, %v571
        %v573 = vpop.f32.mrb[0].mxu0
        %v574 = vadd.f32 %v473, %v573
        %575 = vmatprep.mubr.f32.mxu0 0.0
        %576 = vmatmul.mubr.f32.gmra.mrb[0].mxu0 %v491
        %v577 = vpop.f32.mrb[0].mxu0
        %v578 = vadd.f32 %v478, %v577
        %v579 = vpop.f32.mrb[0].mxu0
        %v580 = vadd.f32 %v478, %v579
        %581 = vdwg.mxu0
        %v582 = vxor.u32 %v560, 2147483648
        %v583 = vxor.u32 %v562, 2147483648
        %v584 = vxor.u32 %v566, 2147483648
        %v585 = vxor.u32 %v568, 2147483648
        %v586 = vxor.u32 %v572, 2147483648
        %v587 = vxor.u32 %v574, 2147483648
        %v588 = vxor.u32 %v578, 2147483648
        %v589 = vxor.u32 %v580, 2147483648
        %v590 = vmul.f32 %v582, 1.442695
        %v591 = vpow.pop %v590
        %v592 = vmul.f32 %v583, 1.442695
        %v593 = vpow.pop %v592
        %v594 = vmul.f32 %v584, 1.442695
        %v595 = vpow.pop %v594
        %v596 = vmul.f32 %v585, 1.442695
        %v597 = vpow.pop %v596
        %v598 = vmul.f32 %v586, 1.442695
        %v599 = vpow.pop %v598
        %v600 = vmul.f32 %v587, 1.442695
        %v601 = vpow.pop %v600
        %v602 = vmul.f32 %v588, 1.442695
        %v603 = vpow.pop %v602
        %v604 = vmul.f32 %v589, 1.442695
        %v605 = vpow.pop %v604
        %v606 = vadd.f32 %v591, 1.0
        %v607 = vadd.f32 %v593, 1.0
        %v608 = vadd.f32 %v595, 1.0
        %v609 = vadd.f32 %v597, 1.0
        %v610 = vadd.f32 %v599, 1.0
        %v611 = vadd.f32 %v601, 1.0
        %v612 = vadd.f32 %v603, 1.0
        %v613 = vadd.f32 %v605, 1.0
        %v614 = vrcp.pop %v606
        %v615 = vmul.f32 1.0, %v614
        %v616 = vrcp.pop %v607
        %v617 = vmul.f32 1.0, %v616
        %v618 = vrcp.pop %v608
        %v619 = vmul.f32 1.0, %v618
        %v620 = vrcp.pop %v609
        %v621 = vmul.f32 1.0, %v620
        %v622 = vrcp.pop %v610
        %v623 = vmul.f32 1.0, %v622
        %v624 = vrcp.pop %v611
        %v625 = vmul.f32 1.0, %v624
        %v626 = vrcp.pop %v612
        %v627 = vmul.f32 1.0, %v626
        %v628 = vrcp.pop %v613
        %v629 = vmul.f32 1.0, %v628
        %v630 = vmul.f32 %v560, %v615
        %v631 = vmul.f32 %v562, %v617
        %v632 = vmul.f32 %v566, %v619
        %v633 = vmul.f32 %v568, %v621
        %v634 = vmul.f32 %v572, %v623
        %v635 = vmul.f32 %v574, %v625
        %v636 = vmul.f32 %v578, %v627
        %v637 = vmul.f32 %v580, %v629
        %v638 = vld [vmem:[%s3] sm:$0xff]
        %v639 = vld [vmem:[%s3 + $0x8] sm:$0xff]
        %v640 = vld [vmem:[%s3 + $0x10] sm:$0xff]
        %v641 = vld [vmem:[%s3 + $0x18] sm:$0xff]
        %vm642 = vcmask 261120
        %v644 = vsel %vm642, %v638, 0
        %v647 = vsel %vm642, %v639, 0
        %v650 = vsel %vm642, %v640, 0
        %v653 = vsel %vm642, %v641, 0
        %655 = vmatprep.subr.mxu0 %v631
        %656 = vmatpush1.msra.mxu0 %v630
        %657 = vmatprep.subr.mxu0 %v633
        %658 = vmatpush1.msra.mxu0 %v632
        %659 = vmatprep.subr.mxu0 %v635
        %660 = vmatpush1.msra.mxu0 %v634
        %661 = vmatprep.subr.mxu0 %v637
        %662 = vmatpush1.msra.mxu0 %v636
        %663 = vmatprep.subr.mxu0 0.0
        %664 = vmatpush1.msra.mxu0 0.0
        %665 = vmatprep.subr.mxu0 0.0
        %666 = vmatpush1.msra.mxu0 0.0
        %667 = vmatprep.subr.mxu0 0.0
        %668 = vmatpush1.msra.mxu0 0.0
        %669 = vmatprep.subr.mxu0 0.0
        %670 = vmatpush1.msra.mxu0 0.0
        %671 = vmatprep.subr.mxu0 0.0
        %672 = vmatpush1.msra.mxu0 0.0
        %673 = vmatprep.subr.mxu0 0.0
        %674 = vmatpush1.msra.mxu0 0.0
        %675 = vmatprep.subr.mxu0 0.0
        %676 = vmatpush1.msra.mxu0 0.0
        %677 = vmatprep.subr.mxu0 0.0
        %678 = vmatpush1.msra.mxu0 0.0
        %679 = vmatprep.subr.mxu0 0.0
        %680 = vmatpush1.msra.mxu0 0.0
        %681 = vmatprep.subr.mxu0 0.0
        %682 = vmatpush1.msra.mxu0 0.0
        %683 = vmatprep.subr.mxu0 0.0
        %684 = vmatpush1.msra.mxu0 0.0
        %685 = vmatprep.subr.mxu0 0.0
        %686 = vmatpush1.msra.mxu0 0.0
        %687 = vmatprep.subr.mxu0 0.0
        %688 = vmatpush1.msra.mxu0 0.0
        %689 = vmatprep.subr.mxu0 0.0
        %690 = vmatpush1.msra.mxu0 0.0
        %691 = vmatprep.subr.mxu0 0.0
        %692 = vmatpush1.msra.mxu0 0.0
        %693 = vmatprep.subr.mxu0 0.0
        %694 = vmatpush1.msra.mxu0 0.0
        %695 = vmatprep.subr.mxu0 0.0
        %696 = vmatpush1.msra.mxu0 0.0
        %697 = vmatprep.subr.mxu0 0.0
        %698 = vmatpush1.msra.mxu0 0.0
        %699 = vmatprep.subr.mxu0 0.0
        %700 = vmatpush1.msra.mxu0 0.0
        %701 = vmatprep.subr.mxu0 0.0
        %702 = vmatpush1.msra.mxu0 0.0
        %703 = vmatprep.subr.mxu0 0.0
        %704 = vmatpush1.msra.mxu0 0.0
        %705 = vmatprep.subr.mxu0 0.0
        %706 = vmatpush1.msra.mxu0 0.0
        %707 = vmatprep.subr.mxu0 0.0
        %708 = vmatpush1.msra.mxu0 0.0
        %709 = vmatprep.subr.mxu0 0.0
        %710 = vmatpush1.msra.mxu0 0.0
        %711 = vmatprep.subr.mxu0 0.0
        %712 = vmatpush1.msra.mxu0 0.0
        %713 = vmatprep.subr.mxu0 0.0
        %714 = vmatpush1.msra.mxu0 0.0
        %715 = vmatprep.subr.mxu0 0.0
        %716 = vmatpush1.msra.mxu0 0.0
        %717 = vmatprep.subr.mxu0 0.0
        %718 = vmatpush1.msra.mxu0 0.0
        %719 = vmatprep.mubr.f32.mxu0 0.0
        %720 = vmatmul.mubr.f32.gmra.mrb[0].mxu0 %v644
        %v721 = vpop.f32.mrb[0].mxu0
        %v722 = vadd.f32 0.0, %v721
        %v723 = vpop.f32.mrb[0].mxu0
        %v724 = vadd.f32 0.0, %v723
        %725 = vmatprep.mubr.f32.mxu0 0.0
        %726 = vmatmul.mubr.f32.gmra.mrb[0].mxu0 %v647
        %v727 = vpop.f32.mrb[0].mxu0
        %v728 = vadd.f32 0.0, %v727
        %v729 = vpop.f32.mrb[0].mxu0
        %v730 = vadd.f32 0.0, %v729
        %731 = vmatprep.mubr.f32.mxu0 0.0
        %732 = vmatmul.mubr.f32.gmra.mrb[0].mxu0 %v650
        %v733 = vpop.f32.mrb[0].mxu0
        %v734 = vadd.f32 0.0, %v733
        %v735 = vpop.f32.mrb[0].mxu0
        %v736 = vadd.f32 0.0, %v735
        %737 = vmatprep.mubr.f32.mxu0 0.0
        %738 = vmatmul.mubr.f32.gmra.mrb[0].mxu0 %v653
        %v739 = vpop.f32.mrb[0].mxu0
        %v740 = vadd.f32 0.0, %v739
        %v741 = vpop.f32.mrb[0].mxu0
        %v742 = vadd.f32 0.0, %v741
        %743 = vdwg.mxu0
        %v744 = vadd.f32 %v722, %v724
        %745 = vadd.xlane.f32.xlu0 %v744
        %v746 = vpop.xlane.xlu0 %745
        %v747 = vadd.f32 %v728, %v730
        %748 = vadd.xlane.f32.xlu0 %v747
        %v749 = vpop.xlane.xlu0 %748
        %v750 = vadd.f32 %v734, %v736
        %751 = vadd.xlane.f32.xlu0 %v750
        %v752 = vpop.xlane.xlu0 %751
        %v753 = vadd.f32 %v740, %v742
        %754 = vadd.xlane.f32.xlu0 %v753
        %v755 = vpop.xlane.xlu0 %754
        %v756 = vrcp.pop 256.0
        %v757 = vmul.f32 %v746, %v756
        %v758 = vmul.f32 %v749, %v756
        %v759 = vmul.f32 %v752, %v756
        %v760 = vmul.f32 %v755, %v756
        %v761 = vld [vmem:[%s4] sm:$0xff]
        %v762 = vld [vmem:[%s4 + $0x8] sm:$0xff]
        %v763 = vld [vmem:[%s4 + $0x10] sm:$0xff]
        %v764 = vld [vmem:[%s4 + $0x18] sm:$0xff]
        %v765 = vadd.f32 %v757, %v761
        %v766 = vadd.f32 %v758, %v762
        %v767 = vadd.f32 %v759, %v763
        %v768 = vadd.f32 %v760, %v764
        %v769 = vxor.u32 %v765, 2147483648
        %v770 = vxor.u32 %v766, 2147483648
        %v771 = vxor.u32 %v767, 2147483648
        %v772 = vxor.u32 %v768, 2147483648
        %v773 = vmul.f32 %v769, 1.442695
        %v774 = vpow.pop %v773
        %v775 = vmul.f32 %v770, 1.442695
        %v776 = vpow.pop %v775
        %v777 = vmul.f32 %v771, 1.442695
        %v778 = vpow.pop %v777
        %v779 = vmul.f32 %v772, 1.442695
        %v780 = vpow.pop %v779
        %v781 = vadd.f32 %v774, 1.0
        %v782 = vadd.f32 %v776, 1.0
        %v783 = vadd.f32 %v778, 1.0
        %v784 = vadd.f32 %v780, 1.0
        %v785 = vrcp.pop %v781
        %v786 = vmul.f32 1.0, %v785
        %v787 = vrcp.pop %v782
        %v788 = vmul.f32 1.0, %v787
        %v789 = vrcp.pop %v783
        %v790 = vmul.f32 1.0, %v789
        %v791 = vrcp.pop %v784
        %v792 = vmul.f32 1.0, %v791
        %794 = vset.pattern.permute.xlu0 0
        %795 = vperm.xlu0 %794, %v786
        %v796 = vpop.permute.xlu0 %795
        %799 = vset.pattern.permute.xlu0 0
        %800 = vperm.xlu0 %799, %v788
        %v801 = vpop.permute.xlu0 %800
        %804 = vset.pattern.permute.xlu0 0
        %805 = vperm.xlu0 %804, %v790
        %v806 = vpop.permute.xlu0 %805
        %809 = vset.pattern.permute.xlu0 0
        %810 = vperm.xlu0 %809, %v792
        %v811 = vpop.permute.xlu0 %810
        %v813 = vmul.f32 %v630, %v796
        %v814 = vmul.f32 %v631, %v796
        %v815 = vmul.f32 %v632, %v801
        %v816 = vmul.f32 %v633, %v801
        %v817 = vmul.f32 %v634, %v806
        %v818 = vmul.f32 %v635, %v806
        %v819 = vmul.f32 %v636, %v811
        %v820 = vmul.f32 %v637, %v811
        %v821 = vld [vmem:[%s7] sm:$0xff]
        %v822 = vld [vmem:[%s8] sm:$0xff]
        %824 = vset.pattern.permute.xlu0 0
        %825 = vperm.xlu0 %824, %v822
        %v826 = vpop.permute.xlu0 %825
        %v829 = vsel %vm642, %v821, 0
        %831 = vmatprep.subr.mxu0 %v814
        %832 = vmatpush1.msra.mxu0 %v813
        %833 = vmatprep.subr.mxu0 %v816
        %834 = vmatpush1.msra.mxu0 %v815
        %835 = vmatprep.subr.mxu0 %v818
        %836 = vmatpush1.msra.mxu0 %v817
        %837 = vmatprep.subr.mxu0 %v820
        %838 = vmatpush1.msra.mxu0 %v819
        %839 = vmatprep.subr.mxu0 0.0
        %840 = vmatpush1.msra.mxu0 0.0
        %841 = vmatprep.subr.mxu0 0.0
        %842 = vmatpush1.msra.mxu0 0.0
        %843 = vmatprep.subr.mxu0 0.0
        %844 = vmatpush1.msra.mxu0 0.0
        %845 = vmatprep.subr.mxu0 0.0
        %846 = vmatpush1.msra.mxu0 0.0
        %847 = vmatprep.subr.mxu0 0.0
        %848 = vmatpush1.msra.mxu0 0.0
        %849 = vmatprep.subr.mxu0 0.0
        %850 = vmatpush1.msra.mxu0 0.0
        %851 = vmatprep.subr.mxu0 0.0
        %852 = vmatpush1.msra.mxu0 0.0
        %853 = vmatprep.subr.mxu0 0.0
        %854 = vmatpush1.msra.mxu0 0.0
        %855 = vmatprep.subr.mxu0 0.0
        %856 = vmatpush1.msra.mxu0 0.0
        %857 = vmatprep.subr.mxu0 0.0
        %858 = vmatpush1.msra.mxu0 0.0
        %859 = vmatprep.subr.mxu0 0.0
        %860 = vmatpush1.msra.mxu0 0.0
        %861 = vmatprep.subr.mxu0 0.0
        %862 = vmatpush1.msra.mxu0 0.0
        %863 = vmatprep.subr.mxu0 0.0
        %864 = vmatpush1.msra.mxu0 0.0
        %865 = vmatprep.subr.mxu0 0.0
        %866 = vmatpush1.msra.mxu0 0.0
        %867 = vmatprep.subr.mxu0 0.0
        %868 = vmatpush1.msra.mxu0 0.0
        %869 = vmatprep.subr.mxu0 0.0
        %870 = vmatpush1.msra.mxu0 0.0
        %871 = vmatprep.subr.mxu0 0.0
        %872 = vmatpush1.msra.mxu0 0.0
        %873 = vmatprep.subr.mxu0 0.0
        %874 = vmatpush1.msra.mxu0 0.0
        %875 = vmatprep.subr.mxu0 0.0
        %876 = vmatpush1.msra.mxu0 0.0
        %877 = vmatprep.subr.mxu0 0.0
        %878 = vmatpush1.msra.mxu0 0.0
        %879 = vmatprep.subr.mxu0 0.0
        %880 = vmatpush1.msra.mxu0 0.0
        %881 = vmatprep.subr.mxu0 0.0
        %882 = vmatpush1.msra.mxu0 0.0
        %883 = vmatprep.subr.mxu0 0.0
        %884 = vmatpush1.msra.mxu0 0.0
        %885 = vmatprep.subr.mxu0 0.0
        %886 = vmatpush1.msra.mxu0 0.0
        %887 = vmatprep.subr.mxu0 0.0
        %888 = vmatpush1.msra.mxu0 0.0
        %889 = vmatprep.subr.mxu0 0.0
        %890 = vmatpush1.msra.mxu0 0.0
        %891 = vmatprep.subr.mxu0 0.0
        %892 = vmatpush1.msra.mxu0 0.0
        %893 = vmatprep.subr.mxu0 0.0
        %894 = vmatpush1.msra.mxu0 0.0
        %895 = vmatprep.mubr.f32.mxu0 0.0
        %896 = vmatmul.mubr.f32.gmra.mrb[0].mxu0 %v829
        %v897 = vpop.f32.mrb[0].mxu0
        %v898 = vadd.f32 %v826, %v897
        %v899 = vpop.f32.mrb[0].mxu0
        %v900 = vadd.f32 %v826, %v899
        %901 = vdwg.mxu0
        %902 = vst [vmem:[%s437] sm:$0xff] %v898
        %903 = vst [vmem:[%s437 + $0x8] sm:$0xff] %v900
        %v904 = vld [vmem:[%s11] sm:$0xff]
        %v905 = vld [vmem:[%s11 + $0x8] sm:$0xff]
        %v906 = vld [vmem:[%s11 + $0x10] sm:$0xff]
        %v907 = vld [vmem:[%s11 + $0x18] sm:$0xff]
        %v908 = vld [vmem:[%s11 + $0x20] sm:$0xff]
        %v909 = vld [vmem:[%s11 + $0x28] sm:$0xff]
        %v910 = vld [vmem:[%s11 + $0x30] sm:$0xff]
        %v911 = vld [vmem:[%s11 + $0x38] sm:$0xff]
        %v912 = vld [vmem:[%s11 + $0x40] sm:$0xff]
        %v913 = vld [vmem:[%s11 + $0x48] sm:$0xff]
        %v914 = vld [vmem:[%s11 + $0x50] sm:$0xff]
        %v915 = vld [vmem:[%s11 + $0x58] sm:$0xff]
        %v916 = vld [vmem:[%s11 + $0x60] sm:$0xff]
        %v917 = vld [vmem:[%s11 + $0x68] sm:$0xff]
        %v918 = vld [vmem:[%s11 + $0x70] sm:$0xff]
        %v919 = vld [vmem:[%s11 + $0x78] sm:$0xff]
        %v920 = vld [vmem:[%s11 + $0x80] sm:$0xff]
        %v921 = vld [vmem:[%s11 + $0x88] sm:$0xff]
        %v922 = vld [vmem:[%s11 + $0x90] sm:$0xff]
        %v923 = vld [vmem:[%s11 + $0x98] sm:$0xff]
        %v924 = vld [vmem:[%s11 + $0xa0] sm:$0xff]
        %v925 = vld [vmem:[%s11 + $0xa8] sm:$0xff]
        %v926 = vld [vmem:[%s11 + $0xb0] sm:$0xff]
        %v927 = vld [vmem:[%s11 + $0xb8] sm:$0xff]
        %v928 = vld [vmem:[%s11 + $0xc0] sm:$0xff]
        %v929 = vld [vmem:[%s11 + $0xc8] sm:$0xff]
        %v930 = vld [vmem:[%s11 + $0xd0] sm:$0xff]
        %v931 = vld [vmem:[%s11 + $0xd8] sm:$0xff]
        %v932 = vld [vmem:[%s11 + $0xe0] sm:$0xff]
        %v933 = vld [vmem:[%s11 + $0xe8] sm:$0xff]
        %v934 = vld [vmem:[%s11 + $0xf0] sm:$0xff]
        %v935 = vld [vmem:[%s11 + $0xf8] sm:$0xff]
        %936 = vmatprep.subr.mxu0 0.0
        %937 = vmatpush1.msra.mxu0 %v904
        %938 = vmatprep.subr.mxu0 0.0
        %939 = vmatpush1.msra.mxu0 %v905
        %940 = vmatprep.subr.mxu0 0.0
        %941 = vmatpush1.msra.mxu0 %v906
        %942 = vmatprep.subr.mxu0 0.0
        %943 = vmatpush1.msra.mxu0 %v907
        %944 = vmatprep.subr.mxu0 0.0
        %945 = vmatpush1.msra.mxu0 %v908
        %946 = vmatprep.subr.mxu0 0.0
        %947 = vmatpush1.msra.mxu0 %v909
        %948 = vmatprep.subr.mxu0 0.0
        %949 = vmatpush1.msra.mxu0 %v910
        %950 = vmatprep.subr.mxu0 0.0
        %951 = vmatpush1.msra.mxu0 %v911
        %952 = vmatprep.subr.mxu0 0.0
        %953 = vmatpush1.msra.mxu0 %v912
        %954 = vmatprep.subr.mxu0 0.0
        %955 = vmatpush1.msra.mxu0 %v913
        %956 = vmatprep.subr.mxu0 0.0
        %957 = vmatpush1.msra.mxu0 %v914
        %958 = vmatprep.subr.mxu0 0.0
        %959 = vmatpush1.msra.mxu0 %v915
        %960 = vmatprep.subr.mxu0 0.0
        %961 = vmatpush1.msra.mxu0 %v916
        %962 = vmatprep.subr.mxu0 0.0
        %963 = vmatpush1.msra.mxu0 %v917
        %964 = vmatprep.subr.mxu0 0.0
        %965 = vmatpush1.msra.mxu0 %v918
        %966 = vmatprep.subr.mxu0 0.0
        %967 = vmatpush1.msra.mxu0 %v919
        %968 = vmatprep.subr.mxu0 0.0
        %969 = vmatpush1.msra.mxu0 %v920
        %970 = vmatprep.subr.mxu0 0.0
        %971 = vmatpush1.msra.mxu0 %v921
        %972 = vmatprep.subr.mxu0 0.0
        %973 = vmatpush1.msra.mxu0 %v922
        %974 = vmatprep.subr.mxu0 0.0
        %975 = vmatpush1.msra.mxu0 %v923
        %976 = vmatprep.subr.mxu0 0.0
        %977 = vmatpush1.msra.mxu0 %v924
        %978 = vmatprep.subr.mxu0 0.0
        %979 = vmatpush1.msra.mxu0 %v925
        %980 = vmatprep.subr.mxu0 0.0
        %981 = vmatpush1.msra.mxu0 %v926
        %982 = vmatprep.subr.mxu0 0.0
        %983 = vmatpush1.msra.mxu0 %v927
        %984 = vmatprep.subr.mxu0 0.0
        %985 = vmatpush1.msra.mxu0 %v928
        %986 = vmatprep.subr.mxu0 0.0
        %987 = vmatpush1.msra.mxu0 %v929
        %988 = vmatprep.subr.mxu0 0.0
        %989 = vmatpush1.msra.mxu0 %v930
        %990 = vmatprep.subr.mxu0 0.0
        %991 = vmatpush1.msra.mxu0 %v931
        %992 = vmatprep.subr.mxu0 0.0
        %993 = vmatpush1.msra.mxu0 %v932
        %994 = vmatprep.subr.mxu0 0.0
        %995 = vmatpush1.msra.mxu0 %v933
        %996 = vmatprep.subr.mxu0 0.0
        %997 = vmatpush1.msra.mxu0 %v934
        %998 = vmatprep.subr.mxu0 0.0
        %999 = vmatpush1.msra.mxu0 %v935
        %1000 = vmatprep.mubr.f32.mxu0 %v814
        %1001 = vmatmul.mubr.f32.gmra.mrb[0].mxu0 %v813
        %v1002 = vpop.f32.mrb[0].mxu0
        %v1003 = vadd.f32 0.0, %v1002
        %v1004 = vpop.f32.mrb[0].mxu0
        %1005 = vmatprep.mubr.f32.mxu0 %v816
        %1006 = vmatmul.mubr.f32.gmra.mrb[0].mxu0 %v815
        %v1007 = vpop.f32.mrb[0].mxu0
        %v1008 = vadd.f32 0.0, %v1007
        %v1009 = vpop.f32.mrb[0].mxu0
        %1010 = vmatprep.mubr.f32.mxu0 %v818
        %1011 = vmatmul.mubr.f32.gmra.mrb[0].mxu0 %v817
        %v1012 = vpop.f32.mrb[0].mxu0
        %v1013 = vadd.f32 0.0, %v1012
        %v1014 = vpop.f32.mrb[0].mxu0
        %1015 = vmatprep.mubr.f32.mxu0 %v820
        %1016 = vmatmul.mubr.f32.gmra.mrb[0].mxu0 %v819
        %v1017 = vpop.f32.mrb[0].mxu0
        %v1018 = vadd.f32 0.0, %v1017
        %v1019 = vpop.f32.mrb[0].mxu0
        %1020 = vdwg.mxu0
        %v1021 = vld [vmem:[%s5] sm:$0xff]
        %v1022 = vld [vmem:[%s5 + $0x8] sm:$0xff]
        %v1023 = vld [vmem:[%s5 + $0x10] sm:$0xff]
        %v1024 = vld [vmem:[%s5 + $0x18] sm:$0xff]
        %v1026 = vsel %vm642, %v1021, 0
        %v1029 = vsel %vm642, %v1022, 0
        %v1032 = vsel %vm642, %v1023, 0
        %v1035 = vsel %vm642, %v1024, 0
        %1037 = vmatprep.subr.mxu0 0.0
        %1038 = vmatpush1.msra.mxu0 %v1003
        %1039 = vmatprep.subr.mxu0 0.0
        %1040 = vmatpush1.msra.mxu0 %v1008
        %1041 = vmatprep.subr.mxu0 0.0
        %1042 = vmatpush1.msra.mxu0 %v1013
        %1043 = vmatprep.subr.mxu0 0.0
        %1044 = vmatpush1.msra.mxu0 %v1018
        %1045 = vmatprep.subr.mxu0 0.0
        %1046 = vmatpush1.msra.mxu0 0.0
        %1047 = vmatprep.subr.mxu0 0.0
        %1048 = vmatpush1.msra.mxu0 0.0
        %1049 = vmatprep.subr.mxu0 0.0
        %1050 = vmatpush1.msra.mxu0 0.0
        %1051 = vmatprep.subr.mxu0 0.0
        %1052 = vmatpush1.msra.mxu0 0.0
        %1053 = vmatprep.subr.mxu0 0.0
        %1054 = vmatpush1.msra.mxu0 0.0
        %1055 = vmatprep.subr.mxu0 0.0
        %1056 = vmatpush1.msra.mxu0 0.0
        %1057 = vmatprep.subr.mxu0 0.0
        %1058 = vmatpush1.msra.mxu0 0.0
        %1059 = vmatprep.subr.mxu0 0.0
        %1060 = vmatpush1.msra.mxu0 0.0
        %1061 = vmatprep.subr.mxu0 0.0
        %1062 = vmatpush1.msra.mxu0 0.0
        %1063 = vmatprep.subr.mxu0 0.0
        %1064 = vmatpush1.msra.mxu0 0.0
        %1065 = vmatprep.subr.mxu0 0.0
        %1066 = vmatpush1.msra.mxu0 0.0
        %1067 = vmatprep.subr.mxu0 0.0
        %1068 = vmatpush1.msra.mxu0 0.0
        %1069 = vmatprep.subr.mxu0 0.0
        %1070 = vmatpush1.msra.mxu0 0.0
        %1071 = vmatprep.subr.mxu0 0.0
        %1072 = vmatpush1.msra.mxu0 0.0
        %1073 = vmatprep.subr.mxu0 0.0
        %1074 = vmatpush1.msra.mxu0 0.0
        %1075 = vmatprep.subr.mxu0 0.0
        %1076 = vmatpush1.msra.mxu0 0.0
        %1077 = vmatprep.subr.mxu0 0.0
        %1078 = vmatpush1.msra.mxu0 0.0
        %1079 = vmatprep.subr.mxu0 0.0
        %1080 = vmatpush1.msra.mxu0 0.0
        %1081 = vmatprep.subr.mxu0 0.0
        %1082 = vmatpush1.msra.mxu0 0.0
        %1083 = vmatprep.subr.mxu0 0.0
        %1084 = vmatpush1.msra.mxu0 0.0
        %1085 = vmatprep.subr.mxu0 0.0
        %1086 = vmatpush1.msra.mxu0 0.0
        %1087 = vmatprep.subr.mxu0 0.0
        %1088 = vmatpush1.msra.mxu0 0.0
        %1089 = vmatprep.subr.mxu0 0.0
        %1090 = vmatpush1.msra.mxu0 0.0
        %1091 = vmatprep.subr.mxu0 0.0
        %1092 = vmatpush1.msra.mxu0 0.0
        %1093 = vmatprep.subr.mxu0 0.0
        %1094 = vmatpush1.msra.mxu0 0.0
        %1095 = vmatprep.subr.mxu0 0.0
        %1096 = vmatpush1.msra.mxu0 0.0
        %1097 = vmatprep.subr.mxu0 0.0
        %1098 = vmatpush1.msra.mxu0 0.0
        %1099 = vmatprep.subr.mxu0 0.0
        %1100 = vmatpush1.msra.mxu0 0.0
        %1101 = vmatprep.mubr.f32.mxu0 0.0
        %1102 = vmatmul.mubr.f32.gmra.mrb[0].mxu0 %v1026
        %v1103 = vpop.f32.mrb[0].mxu0
        %v1104 = vadd.f32 0.0, %v1103
        %v1105 = vpop.f32.mrb[0].mxu0
        %1106 = vmatprep.mubr.f32.mxu0 0.0
        %1107 = vmatmul.mubr.f32.gmra.mrb[0].mxu0 %v1029
        %v1108 = vpop.f32.mrb[0].mxu0
        %v1109 = vadd.f32 0.0, %v1108
        %v1110 = vpop.f32.mrb[0].mxu0
        %1111 = vmatprep.mubr.f32.mxu0 0.0
        %1112 = vmatmul.mubr.f32.gmra.mrb[0].mxu0 %v1032
        %v1113 = vpop.f32.mrb[0].mxu0
        %v1114 = vadd.f32 0.0, %v1113
        %v1115 = vpop.f32.mrb[0].mxu0
        %1116 = vmatprep.mubr.f32.mxu0 0.0
        %1117 = vmatmul.mubr.f32.gmra.mrb[0].mxu0 %v1035
        %v1118 = vpop.f32.mrb[0].mxu0
        %v1119 = vadd.f32 0.0, %v1118
        %v1120 = vpop.f32.mrb[0].mxu0
        %1121 = vdwg.mxu0
        %vm1122 = vcmask 523264
        %v1123 = vsel %vm1122, %v1104, 0.0
        %1124 = vadd.xlane.f32.xlu0 %v1123
        %v1125 = vpop.xlane.xlu0 %1124
        %v1126 = vsel %vm1122, %v1109, 0.0
        %1127 = vadd.xlane.f32.xlu0 %v1126
        %v1128 = vpop.xlane.xlu0 %1127
        %v1129 = vsel %vm1122, %v1114, 0.0
        %1130 = vadd.xlane.f32.xlu0 %v1129
        %v1131 = vpop.xlane.xlu0 %1130
        %v1132 = vsel %vm1122, %v1119, 0.0
        %1133 = vadd.xlane.f32.xlu0 %v1132
        %v1134 = vpop.xlane.xlu0 %1133
        %v1135 = vrcp.pop 64.0
        %v1136 = vmul.f32 %v1125, %v1135
        %v1137 = vmul.f32 %v1128, %v1135
        %v1138 = vmul.f32 %v1131, %v1135
        %v1139 = vmul.f32 %v1134, %v1135
        %v1140 = vld [vmem:[%s6] sm:$0xff]
        %v1141 = vld [vmem:[%s6 + $0x8] sm:$0xff]
        %v1142 = vld [vmem:[%s6 + $0x10] sm:$0xff]
        %v1143 = vld [vmem:[%s6 + $0x18] sm:$0xff]
        %v1144 = vadd.f32 %v1136, %v1140
        %v1145 = vadd.f32 %v1137, %v1141
        %v1146 = vadd.f32 %v1138, %v1142
        %v1147 = vadd.f32 %v1139, %v1143
        %v1148 = vxor.u32 %v1144, 2147483648
        %v1149 = vxor.u32 %v1145, 2147483648
        %v1150 = vxor.u32 %v1146, 2147483648
        %v1151 = vxor.u32 %v1147, 2147483648
        %v1152 = vmul.f32 %v1148, 1.442695
        %v1153 = vpow.pop %v1152
        %v1154 = vmul.f32 %v1149, 1.442695
        %v1155 = vpow.pop %v1154
        %v1156 = vmul.f32 %v1150, 1.442695
        %v1157 = vpow.pop %v1156
        %v1158 = vmul.f32 %v1151, 1.442695
        %v1159 = vpow.pop %v1158
        %v1160 = vadd.f32 %v1153, 1.0
        %v1161 = vadd.f32 %v1155, 1.0
        %v1162 = vadd.f32 %v1157, 1.0
        %v1163 = vadd.f32 %v1159, 1.0
        %v1164 = vrcp.pop %v1160
        %v1165 = vmul.f32 1.0, %v1164
        %v1166 = vrcp.pop %v1161
        %v1167 = vmul.f32 1.0, %v1166
        %v1168 = vrcp.pop %v1162
        %v1169 = vmul.f32 1.0, %v1168
        %v1170 = vrcp.pop %v1163
        %v1171 = vmul.f32 1.0, %v1170
        %1173 = vset.pattern.permute.xlu0 0
        %1174 = vperm.xlu0 %1173, %v1165
        %v1175 = vpop.permute.xlu0 %1174
        %1178 = vset.pattern.permute.xlu0 0
        %1179 = vperm.xlu0 %1178, %v1167
        %v1180 = vpop.permute.xlu0 %1179
        %1183 = vset.pattern.permute.xlu0 0
        %1184 = vperm.xlu0 %1183, %v1169
        %v1185 = vpop.permute.xlu0 %1184
        %1188 = vset.pattern.permute.xlu0 0
        %1189 = vperm.xlu0 %1188, %v1171
        %v1190 = vpop.permute.xlu0 %1189
        %v1192 = vmul.f32 %v1003, %v1175
        %v1193 = vmul.f32 %v1008, %v1180
        %v1194 = vmul.f32 %v1013, %v1185
        %v1195 = vmul.f32 %v1018, %v1190
        %v1196 = vld [vmem:[%s9] sm:$0xff]
        %v1197 = vld [vmem:[%s10] sm:$0xff]
        %1199 = vset.pattern.permute.xlu0 0
        %1200 = vperm.xlu0 %1199, %v1197
        %v1201 = vpop.permute.xlu0 %1200
        %v1204 = vsel %vm642, %v1196, 0
        %1206 = vmatprep.subr.mxu0 0.0
        %1207 = vmatpush1.msra.mxu0 %v1192
        %1208 = vmatprep.subr.mxu0 0.0
        %1209 = vmatpush1.msra.mxu0 %v1193
        %1210 = vmatprep.subr.mxu0 0.0
        %1211 = vmatpush1.msra.mxu0 %v1194
        %1212 = vmatprep.subr.mxu0 0.0
        %1213 = vmatpush1.msra.mxu0 %v1195
        %1214 = vmatprep.subr.mxu0 0.0
        %1215 = vmatpush1.msra.mxu0 0.0
        %1216 = vmatprep.subr.mxu0 0.0
        %1217 = vmatpush1.msra.mxu0 0.0
        %1218 = vmatprep.subr.mxu0 0.0
        %1219 = vmatpush1.msra.mxu0 0.0
        %1220 = vmatprep.subr.mxu0 0.0
        %1221 = vmatpush1.msra.mxu0 0.0
        %1222 = vmatprep.subr.mxu0 0.0
        %1223 = vmatpush1.msra.mxu0 0.0
        %1224 = vmatprep.subr.mxu0 0.0
        %1225 = vmatpush1.msra.mxu0 0.0
        %1226 = vmatprep.subr.mxu0 0.0
        %1227 = vmatpush1.msra.mxu0 0.0
        %1228 = vmatprep.subr.mxu0 0.0
        %1229 = vmatpush1.msra.mxu0 0.0
        %1230 = vmatprep.subr.mxu0 0.0
        %1231 = vmatpush1.msra.mxu0 0.0
        %1232 = vmatprep.subr.mxu0 0.0
        %1233 = vmatpush1.msra.mxu0 0.0
        %1234 = vmatprep.subr.mxu0 0.0
        %1235 = vmatpush1.msra.mxu0 0.0
        %1236 = vmatprep.subr.mxu0 0.0
        %1237 = vmatpush1.msra.mxu0 0.0
        %1238 = vmatprep.subr.mxu0 0.0
        %1239 = vmatpush1.msra.mxu0 0.0
        %1240 = vmatprep.subr.mxu0 0.0
        %1241 = vmatpush1.msra.mxu0 0.0
        %1242 = vmatprep.subr.mxu0 0.0
        %1243 = vmatpush1.msra.mxu0 0.0
        %1244 = vmatprep.subr.mxu0 0.0
        %1245 = vmatpush1.msra.mxu0 0.0
        %1246 = vmatprep.subr.mxu0 0.0
        %1247 = vmatpush1.msra.mxu0 0.0
        %1248 = vmatprep.subr.mxu0 0.0
        %1249 = vmatpush1.msra.mxu0 0.0
        %1250 = vmatprep.subr.mxu0 0.0
        %1251 = vmatpush1.msra.mxu0 0.0
        %1252 = vmatprep.subr.mxu0 0.0
        %1253 = vmatpush1.msra.mxu0 0.0
        %1254 = vmatprep.subr.mxu0 0.0
        %1255 = vmatpush1.msra.mxu0 0.0
        %1256 = vmatprep.subr.mxu0 0.0
        %1257 = vmatpush1.msra.mxu0 0.0
        %1258 = vmatprep.subr.mxu0 0.0
        %1259 = vmatpush1.msra.mxu0 0.0
        %1260 = vmatprep.subr.mxu0 0.0
        %1261 = vmatpush1.msra.mxu0 0.0
        %1262 = vmatprep.subr.mxu0 0.0
        %1263 = vmatpush1.msra.mxu0 0.0
        %1264 = vmatprep.subr.mxu0 0.0
        %1265 = vmatpush1.msra.mxu0 0.0
        %1266 = vmatprep.subr.mxu0 0.0
        %1267 = vmatpush1.msra.mxu0 0.0
        %1268 = vmatprep.subr.mxu0 0.0
        %1269 = vmatpush1.msra.mxu0 0.0
        %1270 = vmatprep.mubr.f32.mxu0 0.0
        %1271 = vmatmul.mubr.f32.gmra.mrb[0].mxu0 %v1204
        %v1272 = vpop.f32.mrb[0].mxu0
        %v1273 = vadd.f32 %v1201, %v1272
        %v1274 = vpop.f32.mrb[0].mxu0
        %1275 = vdwg.mxu0
        %1276 = vst.msk [vmem:[%s444] sm:$0xff] %vm1122, %v1273
        %s1277 = sand.u32 %s296, 1
        %s1278 = scalar_lea.sflag [#allocation3], %s1277
        %s1279 = sand.u32 %s296, 1
        %s1280 = smul.addr %s1279, 16
        %s1281 = scalar_lea.vmem [#allocation2], %s1280
        %s1282 = sand.u32 %s322, 1
        %s1283 = scalar_lea.sflag [#allocation5], %s1282
        %s1284 = sand.u32 %s322, 1
        %s1285 = smul.addr %s1284, 8
        %s1286 = scalar_lea.vmem [#allocation4], %s1285
        // Predicated region
        $region69: #{tpu_custom_call.1} parent=67 // pred_check
          %p1287 = pneg %p306
        $region70: #{tpu_custom_call.1} parent=67 // pred_check_branch
          %1289 = sbr.rel (%p1287) target = $region72
        $region71: #{tpu_custom_call.1} parent=67 // pred_region
          %s1291 = ssub.s32 256, 256
          %1292 = vsyncadd %s1278, %s1291
          %s1293 = smul.addr %s31, 2
          %s1294 = smul.addr %s1293, 128
          %s1295 = scalar_lea.hbm %s12, %s1294
          %s1297 = sshll.u32 %s1281, 4
          %s1298 = int_to_ptr.vmem [resolvable:$true] %s1297
          %1300 = dma.vmem_to_hbm [thread:$0]  %s1298, 256, %s1295, %s1278
        $region72: #{tpu_custom_call.1} parent=67 // pred_fallthru
          _
        // Predicated region
        $region73: #{tpu_custom_call.1} parent=67 // pred_check
          %p1301 = pneg %p332
        $region74: #{tpu_custom_call.1} parent=67 // pred_check_branch
          %1303 = sbr.rel (%p1301) target = $region76
        $region75: #{tpu_custom_call.1} parent=67 // pred_region
          %s1305 = ssub.s32 128, 128
          %1306 = vsyncadd %s1283, %s1305
          %s1307 = smul.addr %s31, 128
          %s1308 = scalar_lea.hbm %s13, %s1307
          %s1310 = sshll.u32 %s1286, 4
          %s1311 = int_to_ptr.vmem [resolvable:$true] %s1310
          %1313 = dma.vmem_to_hbm [thread:$0]  %s1311, 128, %s1308, %s1283
        $region76: #{tpu_custom_call.1} parent=67 // pred_fallthru
          _
      $region68: #{tpu_custom_call.1} parent=5 // pred_fallthru
        _
      %p1314 = scmp.le.s32.totalorder 2, %s26
      // Predicated region
      $region77: #{tpu_custom_call.1} parent=5 // pred_check
        %p1315 = pneg %p1314
      $region78: #{tpu_custom_call.1} parent=5 // pred_check_branch
        %1317 = sbr.rel (%p1315) target = $region80
      $region79: #{tpu_custom_call.1} parent=5 // pred_region
        %s1318 = ssub.s32 %s26, 2
        // Predicated region
        $region81: #{tpu_custom_call.1} parent=79 // pred_check
          %p1319 = pneg %p312
        $region82: #{tpu_custom_call.1} parent=79 // pred_check_branch
          %1321 = sbr.rel (%p1319) target = $region84
        $region83: #{tpu_custom_call.1} parent=79 // pred_region
          %s1322 = sand.u32 %s297, 1
          %s1323 = scalar_lea.sflag [#allocation3], %s1322
          %s1324 = sand.u32 %s297, 1
          %s1325 = smul.addr %s1324, 16
          %s1326 = scalar_lea.vmem [#allocation2], %s1325
          %1327 = dma.done %s1323, 256
        $region84: #{tpu_custom_call.1} parent=79 // pred_fallthru
          _
        // Predicated region
        $region85: #{tpu_custom_call.1} parent=79 // pred_check
          %p1328 = pneg %p338
        $region86: #{tpu_custom_call.1} parent=79 // pred_check_branch
          %1330 = sbr.rel (%p1328) target = $region88
        $region87: #{tpu_custom_call.1} parent=79 // pred_region
          %s1331 = sand.u32 %s323, 1
          %s1332 = scalar_lea.sflag [#allocation5], %s1331
          %s1333 = sand.u32 %s323, 1
          %s1334 = smul.addr %s1333, 8
          %s1335 = scalar_lea.vmem [#allocation4], %s1334
          %1336 = dma.done %s1332, 128
        $region88: #{tpu_custom_call.1} parent=79 // pred_fallthru
          _
      $region80: #{tpu_custom_call.1} parent=5 // pred_fallthru
        _
    $region6: #{tpu_custom_call.1} parent=1 // loop_footer
      %s30 = sadd.s32 1, %s26
    $region7: #{tpu_custom_call.1} parent=1 // loop_footer_branch
      %25 = sbr.rel target = $region3
    $region8: #{tpu_custom_call.1} parent=1 // loop_exit
      _
    %1337 = vsyncpa [#allocation3], 1
    %s1338 = scalar_lea.sflag [#allocation3], 1
    %1339 = vsyncpa %s1338, 1
    %1340 = vsyncpa [#allocation5], 1
    %s1341 = scalar_lea.sflag [#allocation5], 1
    %1342 = vsyncpa %s1341, 1

</llo_original>
